<compile_context>
chip_gen: v5e
topology: v5e:2x2
jax: 0.10.0
libtpu: 0.0.40
codegen_flags: <defaults>
</compile_context>

<pallas_src>
import functools
import math

import jax
import jax.numpy as jnp
from jax.experimental import pallas as pl
from jax.experimental.pallas import tpu as pltpu

LN_EPS = 1e-6    # TODO(synk): match owl_wms LayerNorm eps
RMS_EPS = 1e-6   # TODO(synk): match owl_wms QKNorm (RMSNorm) eps
VMEM_LIMIT = 64 * 1024 * 1024


def _pick_tile(n: int, target: int = 256) -> int:
    """Largest divisor of n that is <= target and a multiple of 8 (fallback n)."""
    if n <= target:
        return n
    for t in range(target, 7, -1):
        if n % t == 0 and t % 8 == 0:
            return t
    return n


# ----------------------------------------------------------------------------
# Kernel A: AdaLN1 -> QKV projection -> per-head QK RMSNorm
# ----------------------------------------------------------------------------
def adaln_qkv_kernel(x_ref, sc_ref, sh_ref,
                     wq_ref, bq_ref, wk_ref, bk_ref, wv_ref, bv_ref,
                     qw_ref, kw_ref,
                     q_ref, k_ref, v_ref,
                     *, n_heads, head_dim, ln_eps, rms_eps):
    x = x_ref[0].astype(jnp.float32)            # [TN, D]
    D = x.shape[-1]
    scale = sc_ref[0].astype(jnp.float32)       # [1, D]
    shift = sh_ref[0].astype(jnp.float32)       # [1, D]

    # LayerNorm (no affine), single-pass statistics.
    mu = jnp.mean(x, axis=-1, keepdims=True)
    ms = jnp.mean(x * x, axis=-1, keepdims=True)
    xn = (x - mu) * jax.lax.rsqrt(ms - mu * mu + ln_eps)
    h = xn * (1.0 + scale) + shift

    def proj(w_ref, b_ref):
        return (jnp.dot(h, w_ref[...].astype(jnp.float32),
                        preferred_element_type=jnp.float32)
                + b_ref[...].astype(jnp.float32))

    q = proj(wq_ref, bq_ref)
    k = proj(wk_ref, bk_ref)
    v = proj(wv_ref, bv_ref)

    # Per-head RMS norm on q/k without in-kernel reshapes: block-indicator
    # matmuls keep the [TN, D] lane layout intact.
    row = jax.lax.broadcasted_iota(jnp.int32, (D, n_heads), 0)
    col = jax.lax.broadcasted_iota(jnp.int32, (D, n_heads), 1)
    sel = ((row >= col * head_dim) & (row < (col + 1) * head_dim)).astype(jnp.float32)
    rowT = jax.lax.broadcasted_iota(jnp.int32, (n_heads, D), 1)
    colT = jax.lax.broadcasted_iota(jnp.int32, (n_heads, D), 0)
    selT = ((rowT >= colT * head_dim) & (rowT < (colT + 1) * head_dim)).astype(jnp.float32)

    def head_rms(t, w_ref):
        ssq = jnp.dot(t * t, sel, preferred_element_type=jnp.float32)      # [TN, H]
        inv = jax.lax.rsqrt(ssq * (1.0 / head_dim) + rms_eps)              # [TN, H]
        inv_full = jnp.dot(inv, selT, preferred_element_type=jnp.float32)  # [TN, D]
        return t * inv_full * w_ref[...].astype(jnp.float32)

    q_ref[0] = head_rms(q, qw_ref).astype(q_ref.dtype)
    k_ref[0] = head_rms(k, kw_ref).astype(k_ref.dtype)
    v_ref[0] = v.astype(v_ref.dtype)


# ----------------------------------------------------------------------------
# Kernel B: flash attention (online softmax) over [B*H, N, dh]
# ----------------------------------------------------------------------------
def flash_attn_kernel(q_ref, k_ref, v_ref, o_ref, m_sc, l_sc, acc_sc, *, sm_scale):
    kv = pl.program_id(2)

    @pl.when(kv == 0)
    def _():
        m_sc[...] = jnp.full_like(m_sc, -jnp.inf)
        l_sc[...] = jnp.zeros_like(l_sc)
        acc_sc[...] = jnp.zeros_like(acc_sc)

    q = q_ref[0].astype(jnp.float32) * sm_scale       # [TQ, dh]
    k = k_ref[0].astype(jnp.float32)                  # [TK, dh]
    v = v_ref[0].astype(jnp.float32)                  # [TK, dh]

    s = jax.lax.dot_general(q, k, (((1,), (1,)), ((), ())),
                            preferred_element_type=jnp.float32)   # [TQ, TK]
    m_prev = m_sc[...]
    m_new = jnp.maximum(m_prev, jnp.max(s, axis=-1, keepdims=True))
    alpha = jnp.exp(m_prev - m_new)
    p = jnp.exp(s - m_new)
    l_sc[...] = alpha * l_sc[...] + jnp.sum(p, axis=-1, keepdims=True)
    acc_sc[...] = alpha * acc_sc[...] + jnp.dot(p, v, preferred_element_type=jnp.float32)
    m_sc[...] = m_new

    @pl.when(kv == pl.num_programs(2) - 1)
    def _():
        o_ref[0] = (acc_sc[...] / l_sc[...]).astype(o_ref.dtype)


# ----------------------------------------------------------------------------
# Kernel C: out-proj + gate1 + residual + AdaLN2 + MLP + gate2 + residual
# ----------------------------------------------------------------------------
def attn_out_mlp_kernel(a_ref, res_ref, g1_ref, sc2_ref, sh2_ref, g2_ref,
                        wo_ref, bo_ref, w1_ref, b1_ref, w2_ref, b2_ref,
                        o_ref, *, ln_eps):
    a = a_ref[0].astype(jnp.float32)            # [TN, D] attention output (pre-proj)
    r = res_ref[0].astype(jnp.float32)          # [TN, D] residual (= block input x)
    g1 = g1_ref[0].astype(jnp.float32)          # [1, D]
    sc2 = sc2_ref[0].astype(jnp.float32)
    sh2 = sh2_ref[0].astype(jnp.float32)
    g2 = g2_ref[0].astype(jnp.float32)

    # attention out-projection, gate1, residual add
    o = (jnp.dot(a, wo_ref[...].astype(jnp.float32), preferred_element_type=jnp.float32)
         + bo_ref[...].astype(jnp.float32))
    x1 = r + o * g1

    # AdaLN2 (single-pass stats)
    mu = jnp.mean(x1, axis=-1, keepdims=True)
    ms = jnp.mean(x1 * x1, axis=-1, keepdims=True)
    xn = (x1 - mu) * jax.lax.rsqrt(ms - mu * mu + ln_eps)
    h = xn * (1.0 + sc2) + sh2

    # MLP: fc1 -> GELU(tanh) -> fc2
    h1 = (jnp.dot(h, w1_ref[...].astype(jnp.float32), preferred_element_type=jnp.float32)
          + b1_ref[...].astype(jnp.float32))
    h1 = jax.nn.gelu(h1, approximate=True)
    m = (jnp.dot(h1, w2_ref[...].astype(jnp.float32), preferred_element_type=jnp.float32)
         + b2_ref[...].astype(jnp.float32))

    o_ref[0] = (x1 + m * g2).astype(o_ref.dtype)


# ----------------------------------------------------------------------------
# Wrapper
# ----------------------------------------------------------------------------
def _split_heads(t, B, N, H, dh):
    return t.reshape(B, N, H, dh).transpose(0, 2, 1, 3).reshape(B * H, N, dh)


def _merge_heads(t, B, N, H, dh):
    return t.reshape(B, H, N, dh).transpose(0, 2, 1, 3).reshape(B, N, H * dh)


def dit_block(x, cond, params, n_heads):
    B, N, D = x.shape
    assert D % n_heads == 0
    dh = D // n_heads
    dtype = x.dtype

    # ---- cond modulation (tiny M=1 matmuls; hoisted out of the kernels) ----
    c = jax.nn.silu(cond.astype(jnp.float32))
    shift1, scale1 = jnp.split(c @ params["w_ada1"] + params["b_ada1"], 2, axis=-1)
    gate1 = c @ params["w_gate1"] + params["b_gate1"]
    shift2, scale2 = jnp.split(c @ params["w_ada2"] + params["b_ada2"], 2, axis=-1)
    gate2 = c @ params["w_gate2"] + params["b_gate2"]

    def bvec(t):  # [B, D] -> [B, 1, D] so it maps onto a (1, 1, D) block
        return t[:, None, :].astype(dtype)

    scale1, shift1, gate1 = bvec(scale1), bvec(shift1), bvec(gate1)
    scale2, shift2, gate2 = bvec(scale2), bvec(shift2), bvec(gate2)

    # Split fused qkv params (avoids odd lane slices inside the kernel).
    w_qkv, b_qkv = params["w_qkv"], params["b_qkv"]
    wq, wk, wv = w_qkv[:, :D], w_qkv[:, D:2 * D], w_qkv[:, 2 * D:]
    bq, bk, bv = b_qkv[:D][None, :], b_qkv[D:2 * D][None, :], b_qkv[2 * D:][None, :]
    qn_w = jnp.tile(params["qn_w"], n_heads)[None, :]     # [1, D]
    kn_w = jnp.tile(params["kn_w"], n_heads)[None, :]

    TN = _pick_tile(N, 256)
    vec_spec = pl.BlockSpec((1, 1, D), lambda b, t: (b, 0, 0))
    tok_spec = pl.BlockSpec((1, TN, D), lambda b, t: (b, t, 0))
    wDD_spec = pl.BlockSpec((D, D), lambda b, t: (0, 0))
    b1D_spec = pl.BlockSpec((1, D), lambda b, t: (0, 0))
    # NOTE: weight blocks are grid-invariant; Pallas will not re-DMA them per
    # step. (pl.Buffered(1) single-buffering left off to keep lowering simple.)

    # ---- Kernel A: adaln1 + qkv + qk_norm ----
    q, k, v = pl.pallas_call(
        functools.partial(adaln_qkv_kernel, n_heads=n_heads, head_dim=dh,
                          ln_eps=LN_EPS, rms_eps=RMS_EPS),
        grid=(B, N // TN),
        in_specs=[tok_spec, vec_spec, vec_spec,
                  wDD_spec, b1D_spec, wDD_spec, b1D_spec, wDD_spec, b1D_spec,
                  b1D_spec, b1D_spec],
        out_specs=[tok_spec, tok_spec, tok_spec],
        out_shape=tuple(jax.ShapeDtypeStruct((B, N, D), dtype) for _ in range(3)),
        compiler_params=pltpu.CompilerParams(
            dimension_semantics=("parallel", "parallel"),
            vmem_limit_bytes=VMEM_LIMIT),
        cost_estimate=pl.CostEstimate(
            flops=int(2 * B * N * D * 3 * D + 16 * B * N * D),
            transcendentals=int(3 * B * N),
            bytes_accessed=int(4 * B * N * D * 4 + 3 * D * D * 4)),
    )(x, scale1, shift1, wq, bq, wk, bk, wv, bv, qn_w, kn_w)

    # ---- head split (layout plumbing, stays in XLA) ----
    qh = _split_heads(q, B, N, n_heads, dh)
    kh = _split_heads(k, B, N, n_heads, dh)
    vh = _split_heads(v, B, N, n_heads, dh)

    # ---- Kernel B: flash attention ----
    TQ = _pick_tile(N, 256)
    TK = _pick_tile(N, 256)
    BH = B * n_heads
    ah = pl.pallas_call(
        functools.partial(flash_attn_kernel, sm_scale=1.0 / math.sqrt(dh)),
        grid=(BH, N // TQ, N // TK),
        in_specs=[
            pl.BlockSpec((1, TQ, dh), lambda b, qi, ki: (b, qi, 0)),
            pl.BlockSpec((1, TK, dh), lambda b, qi, ki: (b, ki, 0)),
            pl.BlockSpec((1, TK, dh), lambda b, qi, ki: (b, ki, 0)),
        ],
        out_specs=pl.BlockSpec((1, TQ, dh), lambda b, qi, ki: (b, qi, 0)),
        out_shape=jax.ShapeDtypeStruct((BH, N, dh), dtype),
        scratch_shapes=[pltpu.VMEM((TQ, 1), jnp.float32),
                        pltpu.VMEM((TQ, 1), jnp.float32),
                        pltpu.VMEM((TQ, dh), jnp.float32)],
        compiler_params=pltpu.CompilerParams(
            dimension_semantics=("parallel", "parallel", "arbitrary"),
            vmem_limit_bytes=VMEM_LIMIT),
        cost_estimate=pl.CostEstimate(
            flops=int(4 * BH * N * N * dh),
            transcendentals=int(BH * N * N),
            bytes_accessed=int(4 * BH * N * dh * 4)),
    )(qh, kh, vh)
    attn = _merge_heads(ah, B, N, n_heads, dh)

    # ---- Kernel C: out proj + gate1 + res + adaln2 + MLP + gate2 + res ----
    wo, bo = params["w_out"], params["b_out"][None, :]
    w1, b1 = params["w_fc1"], params["b_fc1"][None, :]
    w2, b2 = params["w_fc2"], params["b_fc2"][None, :]
    Dh = w1.shape[1]

    y = pl.pallas_call(
        functools.partial(attn_out_mlp_kernel, ln_eps=LN_EPS),
        grid=(B, N // TN),
        in_specs=[tok_spec, tok_spec,
                  vec_spec, vec_spec, vec_spec, vec_spec,
                  wDD_spec, b1D_spec,
                  pl.BlockSpec((D, Dh), lambda b, t: (0, 0)),
                  pl.BlockSpec((1, Dh), lambda b, t: (0, 0)),
                  pl.BlockSpec((Dh, D), lambda b, t: (0, 0)),
                  b1D_spec],
        out_specs=tok_spec,
        out_shape=jax.ShapeDtypeStruct((B, N, D), dtype),
        compiler_params=pltpu.CompilerParams(
            dimension_semantics=("parallel", "parallel"),
            vmem_limit_bytes=VMEM_LIMIT),
        cost_estimate=pl.CostEstimate(
            flops=int(2 * B * N * (D * D + 2 * D * Dh) + 20 * B * N * D),
            transcendentals=int(B * N * (Dh + 1)),
            bytes_accessed=int(3 * B * N * D * 4 + (D * D + 2 * D * Dh) * 4)),
    )(attn, x, gate1, scale2, shift2, gate2, wo, bo, w1, b1, w2, b2)

    return y


# ----------------------------------------------------------------------------
# Pure-JAX reference
# ----------------------------------------------------------------------------
def dit_block_ref(x, cond, params, n_heads):
    B, N, D = x.shape
    dh = D // n_heads

    def ln(t):
        mu = jnp.mean(t, axis=-1, keepdims=True)
        var = jnp.mean(jnp.square(t - mu), axis=-1, keepdims=True)
        return (t - mu) * jax.lax.rsqrt(var + LN_EPS)

    c = jax.nn.silu(cond)
    shift1, scale1 = jnp.split(c @ params["w_ada1"] + params["b_ada1"], 2, axis=-1)
    gate1 = c @ params["w_gate1"] + params["b_gate1"]
    shift2, scale2 = jnp.split(c @ params["w_ada2"] + params["b_ada2"], 2, axis=-1)
    gate2 = c @ params["w_gate2"] + params["b_gate2"]

    # attention branch
    h = ln(x) * (1.0 + scale1[:, None, :]) + shift1[:, None, :]
    qkv = h @ params["w_qkv"] + params["b_qkv"]
    q, k, v = jnp.split(qkv, 3, axis=-1)

    def heads(t):
        return t.reshape(B, N, n_heads, dh).transpose(0, 2, 1, 3)

    q, k, v = heads(q), heads(k), heads(v)

    def rms(t, w):
        inv = jax.lax.rsqrt(jnp.mean(t * t, axis=-1, keepdims=True) + RMS_EPS)
        return t * inv * w

    q = rms(q, params["qn_w"])
    k = rms(k, params["kn_w"])

    s = jnp.einsum("bhnd,bhmd->bhnm", q, k) * (1.0 / math.sqrt(dh))
    p = jax.nn.softmax(s, axis=-1)
    o = jnp.einsum("bhnm,bhmd->bhnd", p, v)
    o = o.transpose(0, 2, 1, 3).reshape(B, N, D)
    o = o @ params["w_out"] + params["b_out"]
    x1 = x + o * gate1[:, None, :]

    # mlp branch
    h2 = ln(x1) * (1.0 + scale2[:, None, :]) + shift2[:, None, :]
    m = jax.nn.gelu(h2 @ params["w_fc1"] + params["b_fc1"], approximate=True)
    m = m @ params["w_fc2"] + params["b_fc2"]
    return x1 + m * gate2[:, None, :]


if __name__ == "__main__":
    B, N, D, H = 2, 8, 32, 4
    dh = D // H

    key = jax.random.PRNGKey(0)
    keys = jax.random.split(key, 24)
    kit = iter(keys)

    def rnd(shape, scale=0.05):
        return jax.random.normal(next(kit), shape, dtype=jnp.float32) * scale

    x = jax.random.normal(next(kit), (B, N, D), dtype=jnp.float32)
    cond = jax.random.normal(next(kit), (B, D), dtype=jnp.float32)

    params = {
        "w_ada1": rnd((D, 2 * D)), "b_ada1": rnd((2 * D,), 0.02),
        "w_gate1": rnd((D, D)),    "b_gate1": rnd((D,), 0.02),
        "w_ada2": rnd((D, 2 * D)), "b_ada2": rnd((2 * D,), 0.02),
        "w_gate2": rnd((D, D)),    "b_gate2": rnd((D,), 0.02),
        "w_qkv": rnd((D, 3 * D)),  "b_qkv": rnd((3 * D,), 0.02),
        "qn_w": 1.0 + rnd((dh,), 0.1),
        "kn_w": 1.0 + rnd((dh,), 0.1),
        "w_out": rnd((D, D)),      "b_out": rnd((D,), 0.02),
        "w_fc1": rnd((D, 4 * D)),  "b_fc1": rnd((4 * D,), 0.02),
        "w_fc2": rnd((4 * D, D)),  "b_fc2": rnd((D,), 0.02),
    }

    fn = jax.jit(functools.partial(dit_block, n_heads=H))
    out = jax.block_until_ready(fn(x, cond, params))

    ref = dit_block_ref(x, cond, params, H)
    assert out.shape == (B, N, D), out.shape
    max_diff = float(jnp.max(jnp.abs(out - ref)))
    assert jnp.allclose(out, ref, atol=2e-3, rtol=2e-3), (
        "mismatch vs reference; max abs diff = %g" % max_diff)

    print("KERNEL_OK")
</pallas_src>

<mosaic_0001>
module attributes {stable_mosaic.version = 11 : i64} {
  func.func @adaln_qkv_kernel(%arg0: i32, %arg1: i32, %arg2: memref<1x8x32xf32, #tpu.memory_space<vmem>>, %arg3: memref<1x1x32xf32, #tpu.memory_space<vmem>>, %arg4: memref<1x1x32xf32, #tpu.memory_space<vmem>>, %arg5: memref<32x32xf32, #tpu.memory_space<vmem>>, %arg6: memref<1x32xf32, #tpu.memory_space<vmem>>, %arg7: memref<32x32xf32, #tpu.memory_space<vmem>>, %arg8: memref<1x32xf32, #tpu.memory_space<vmem>>, %arg9: memref<32x32xf32, #tpu.memory_space<vmem>>, %arg10: memref<1x32xf32, #tpu.memory_space<vmem>>, %arg11: memref<1x32xf32, #tpu.memory_space<vmem>>, %arg12: memref<1x32xf32, #tpu.memory_space<vmem>>, %arg13: memref<1x8x32xf32, #tpu.memory_space<vmem>>, %arg14: memref<1x8x32xf32, #tpu.memory_space<vmem>>, %arg15: memref<1x8x32xf32, #tpu.memory_space<vmem>>) attributes {dimension_semantics = [#tpu.dimension_semantics<parallel>, #tpu.dimension_semantics<parallel>], iteration_bounds = array<i64: 2, 1>, scalar_prefetch = 0 : i64, scratch_operands = 0 : i64, tpu.core_type = #tpu.core_type<tc>, window_params = [{transform_indices = @transform_0, window_bounds = array<i64: 1, 8, 32>}, {transform_indices = @transform_1, window_bounds = array<i64: 1, 1, 32>}, {transform_indices = @transform_2, window_bounds = array<i64: 1, 1, 32>}, {pipeline_mode = #tpu.pipeline_mode<synchronous>, transform_indices = @transform_3, window_bounds = array<i64: 32, 32>}, {pipeline_mode = #tpu.pipeline_mode<synchronous>, transform_indices = @transform_4, window_bounds = array<i64: 1, 32>}, {pipeline_mode = #tpu.pipeline_mode<synchronous>, transform_indices = @transform_5, window_bounds = array<i64: 32, 32>}, {pipeline_mode = #tpu.pipeline_mode<synchronous>, transform_indices = @transform_6, window_bounds = array<i64: 1, 32>}, {pipeline_mode = #tpu.pipeline_mode<synchronous>, transform_indices = @transform_7, window_bounds = array<i64: 32, 32>}, {pipeline_mode = #tpu.pipeline_mode<synchronous>, transform_indices = @transform_8, window_bounds = array<i64: 1, 32>}, {pipeline_mode = #tpu.pipeline_mode<synchronous>, transform_indices = @transform_9, window_bounds = array<i64: 1, 32>}, {pipeline_mode = #tpu.pipeline_mode<synchronous>, transform_indices = @transform_10, window_bounds = array<i64: 1, 32>}, {transform_indices = @transform_11, window_bounds = array<i64: 1, 8, 32>}, {transform_indices = @transform_12, window_bounds = array<i64: 1, 8, 32>}, {transform_indices = @transform_13, window_bounds = array<i64: 1, 8, 32>}]} {
    %c0 = arith.constant 0 : index
    %c0_0 = arith.constant 0 : index
    %c0_1 = arith.constant 0 : index
    %0 = vector.load %arg2[%c0, %c0_0, %c0_1] : memref<1x8x32xf32, #tpu.memory_space<vmem>>, vector<1x8x32xf32>
    %1 = vector.shape_cast %0 : vector<1x8x32xf32> to vector<8x32xf32>
    %c0_2 = arith.constant 0 : index
    %c0_3 = arith.constant 0 : index
    %c0_4 = arith.constant 0 : index
    %2 = vector.load %arg3[%c0_2, %c0_3, %c0_4] : memref<1x1x32xf32, #tpu.memory_space<vmem>>, vector<1x1x32xf32>
    %3 = vector.shape_cast %2 : vector<1x1x32xf32> to vector<1x32xf32>
    %c0_5 = arith.constant 0 : index
    %c0_6 = arith.constant 0 : index
    %c0_7 = arith.constant 0 : index
    %4 = vector.load %arg4[%c0_5, %c0_6, %c0_7] : memref<1x1x32xf32, #tpu.memory_space<vmem>>, vector<1x1x32xf32>
    %5 = vector.shape_cast %4 : vector<1x1x32xf32> to vector<1x32xf32>
    %cst = arith.constant dense<0.000000e+00> : vector<8xf32>
    %6 = vector.multi_reduction <add>, %1, %cst [1] : vector<8x32xf32> to vector<8xf32>
    %7 = vector.shape_cast %6 : vector<8xf32> to vector<8x1xf32>
    %cst_8 = arith.constant 3.200000e+01 : f32
    %8 = vector.broadcast %cst_8 : f32 to vector<8x1xf32>
    %9 = arith.divf %7, %8 : vector<8x1xf32>
    %10 = arith.mulf %1, %1 : vector<8x32xf32>
    %cst_9 = arith.constant dense<0.000000e+00> : vector<8xf32>
    %11 = vector.multi_reduction <add>, %10, %cst_9 [1] : vector<8x32xf32> to vector<8xf32>
    %12 = vector.shape_cast %11 : vector<8xf32> to vector<8x1xf32>
    %cst_10 = arith.constant 3.200000e+01 : f32
    %13 = vector.broadcast %cst_10 : f32 to vector<8x1xf32>
    %14 = arith.divf %12, %13 : vector<8x1xf32>
    %15 = vector.broadcast %9 : vector<8x1xf32> to vector<8x32xf32>
    %16 = arith.subf %1, %15 : vector<8x32xf32>
    %17 = arith.mulf %9, %9 : vector<8x1xf32>
    %18 = arith.subf %14, %17 : vector<8x1xf32>
    %cst_11 = arith.constant 9.99999997E-7 : f32
    %19 = vector.broadcast %cst_11 : f32 to vector<8x1xf32>
    %20 = arith.addf %18, %19 : vector<8x1xf32>
    %21 = math.rsqrt %20 : vector<8x1xf32>
    %22 = vector.broadcast %21 : vector<8x1xf32> to vector<8x32xf32>
    %23 = arith.mulf %16, %22 : vector<8x32xf32>
    %cst_12 = arith.constant 1.000000e+00 : f32
    %24 = vector.broadcast %cst_12 : f32 to vector<1x32xf32>
    %25 = arith.addf %24, %3 : vector<1x32xf32>
    %26 = vector.broadcast %25 : vector<1x32xf32> to vector<8x32xf32>
    %27 = arith.mulf %23, %26 : vector<8x32xf32>
    %28 = vector.broadcast %5 : vector<1x32xf32> to vector<8x32xf32>
    %29 = arith.addf %27, %28 : vector<8x32xf32>
    %c0_13 = arith.constant 0 : index
    %c0_14 = arith.constant 0 : index
    %30 = vector.load %arg5[%c0_13, %c0_14] : memref<32x32xf32, #tpu.memory_space<vmem>>, vector<32x32xf32>
    %cst_15 = arith.constant dense<0.000000e+00> : vector<8x32xf32>
    %31 = tpu.matmul %29, %30, %cst_15 {dimension_numbers = #tpu.dot_dimension_numbers<[1], [0], [0], [1], [0, 0, 1, 1], [], []>} : vector<8x32xf32>, vector<32x32xf32>, vector<8x32xf32> -> vector<8x32xf32>
    %c0_16 = arith.constant 0 : index
    %c0_17 = arith.constant 0 : index
    %32 = vector.load %arg6[%c0_16, %c0_17] : memref<1x32xf32, #tpu.memory_space<vmem>>, vector<1x32xf32>
    %33 = vector.broadcast %32 : vector<1x32xf32> to vector<8x32xf32>
    %34 = arith.addf %31, %33 : vector<8x32xf32>
    %c0_18 = arith.constant 0 : index
    %c0_19 = arith.constant 0 : index
    %35 = vector.load %arg7[%c0_18, %c0_19] : memref<32x32xf32, #tpu.memory_space<vmem>>, vector<32x32xf32>
    %cst_20 = arith.constant dense<0.000000e+00> : vector<8x32xf32>
    %36 = tpu.matmul %29, %35, %cst_20 {dimension_numbers = #tpu.dot_dimension_numbers<[1], [0], [0], [1], [0, 0, 1, 1], [], []>} : vector<8x32xf32>, vector<32x32xf32>, vector<8x32xf32> -> vector<8x32xf32>
    %c0_21 = arith.constant 0 : index
    %c0_22 = arith.constant 0 : index
    %37 = vector.load %arg8[%c0_21, %c0_22] : memref<1x32xf32, #tpu.memory_space<vmem>>, vector<1x32xf32>
    %38 = vector.broadcast %37 : vector<1x32xf32> to vector<8x32xf32>
    %39 = arith.addf %36, %38 : vector<8x32xf32>
    %c0_23 = arith.constant 0 : index
    %c0_24 = arith.constant 0 : index
    %40 = vector.load %arg9[%c0_23, %c0_24] : memref<32x32xf32, #tpu.memory_space<vmem>>, vector<32x32xf32>
    %cst_25 = arith.constant dense<0.000000e+00> : vector<8x32xf32>
    %41 = tpu.matmul %29, %40, %cst_25 {dimension_numbers = #tpu.dot_dimension_numbers<[1], [0], [0], [1], [0, 0, 1, 1], [], []>} : vector<8x32xf32>, vector<32x32xf32>, vector<8x32xf32> -> vector<8x32xf32>
    %c0_26 = arith.constant 0 : index
    %c0_27 = arith.constant 0 : index
    %42 = vector.load %arg10[%c0_26, %c0_27] : memref<1x32xf32, #tpu.memory_space<vmem>>, vector<1x32xf32>
    %43 = vector.broadcast %42 : vector<1x32xf32> to vector<8x32xf32>
    %44 = arith.addf %41, %43 : vector<8x32xf32>
    %45 = tpu.iota {dimensions = array<i32: 0>} : vector<32x4xi32>
    %46 = tpu.iota {dimensions = array<i32: 1>} : vector<32x4xi32>
    %c8_i32 = arith.constant 8 : i32
    %47 = vector.broadcast %c8_i32 : i32 to vector<32x4xi32>
    %48 = arith.muli %46, %47 : vector<32x4xi32>
    %49 = arith.cmpi sge, %45, %48 : vector<32x4xi32>
    %c1_i32 = arith.constant 1 : i32
    %50 = vector.broadcast %c1_i32 : i32 to vector<32x4xi32>
    %51 = arith.addi %46, %50 : vector<32x4xi32>
    %c8_i32_28 = arith.constant 8 : i32
    %52 = vector.broadcast %c8_i32_28 : i32 to vector<32x4xi32>
    %53 = arith.muli %51, %52 : vector<32x4xi32>
    %54 = arith.cmpi slt, %45, %53 : vector<32x4xi32>
    %55 = arith.andi %49, %54 : vector<32x4xi1>
    %56 = arith.extui %55 : vector<32x4xi1> to vector<32x4xi32>
    %57 = arith.sitofp %56 : vector<32x4xi32> to vector<32x4xf32>
    %58 = tpu.iota {dimensions = array<i32: 1>} : vector<4x32xi32>
    %59 = tpu.iota {dimensions = array<i32: 0>} : vector<4x32xi32>
    %c8_i32_29 = arith.constant 8 : i32
    %60 = vector.broadcast %c8_i32_29 : i32 to vector<4x32xi32>
    %61 = arith.muli %59, %60 : vector<4x32xi32>
    %62 = arith.cmpi sge, %58, %61 : vector<4x32xi32>
    %c1_i32_30 = arith.constant 1 : i32
    %63 = vector.broadcast %c1_i32_30 : i32 to vector<4x32xi32>
    %64 = arith.addi %59, %63 : vector<4x32xi32>
    %c8_i32_31 = arith.constant 8 : i32
    %65 = vector.broadcast %c8_i32_31 : i32 to vector<4x32xi32>
    %66 = arith.muli %64, %65 : vector<4x32xi32>
    %67 = arith.cmpi slt, %58, %66 : vector<4x32xi32>
    %68 = arith.andi %62, %67 : vector<4x32xi1>
    %69 = arith.extui %68 : vector<4x32xi1> to vector<4x32xi32>
    %70 = arith.sitofp %69 : vector<4x32xi32> to vector<4x32xf32>
    %71 = arith.mulf %34, %34 : vector<8x32xf32>
    %cst_32 = arith.constant dense<0.000000e+00> : vector<8x4xf32>
    %72 = tpu.matmul %71, %57, %cst_32 {dimension_numbers = #tpu.dot_dimension_numbers<[1], [0], [0], [1], [0, 0, 1, 1], [], []>} : vector<8x32xf32>, vector<32x4xf32>, vector<8x4xf32> -> vector<8x4xf32>
    %cst_33 = arith.constant 1.250000e-01 : f32
    %73 = vector.broadcast %cst_33 : f32 to vector<8x4xf32>
    %74 = arith.mulf %72, %73 : vector<8x4xf32>
    %cst_34 = arith.constant 9.99999997E-7 : f32
    %75 = vector.broadcast %cst_34 : f32 to vector<8x4xf32>
    %76 = arith.addf %74, %75 : vector<8x4xf32>
    %77 = math.rsqrt %76 : vector<8x4xf32>
    %cst_35 = arith.constant dense<0.000000e+00> : vector<8x32xf32>
    %78 = tpu.matmul %77, %70, %cst_35 {dimension_numbers = #tpu.dot_dimension_numbers<[1], [0], [0], [1], [0, 0, 1, 1], [], []>} : vector<8x4xf32>, vector<4x32xf32>, vector<8x32xf32> -> vector<8x32xf32>
    %79 = arith.mulf %34, %78 : vector<8x32xf32>
    %c0_36 = arith.constant 0 : index
    %c0_37 = arith.constant 0 : index
    %80 = vector.load %arg11[%c0_36, %c0_37] : memref<1x32xf32, #tpu.memory_space<vmem>>, vector<1x32xf32>
    %81 = vector.broadcast %80 : vector<1x32xf32> to vector<8x32xf32>
    %82 = arith.mulf %79, %81 : vector<8x32xf32>
    %c0_38 = arith.constant 0 : index
    %c0_39 = arith.constant 0 : index
    %c0_40 = arith.constant 0 : index
    %83 = vector.load %arg13[%c0_38, %c0_39, %c0_40] : memref<1x8x32xf32, #tpu.memory_space<vmem>>, vector<1x8x32xf32>
    %84 = vector.shape_cast %83 : vector<1x8x32xf32> to vector<8x32xf32>
    %85 = vector.shape_cast %82 : vector<8x32xf32> to vector<1x8x32xf32>
    tpu.vector_store %arg13[%c0_38, %c0_39, %c0_40], %85 {strides = array<i32>} : memref<1x8x32xf32, #tpu.memory_space<vmem>>, vector<1x8x32xf32>,
    %86 = arith.mulf %39, %39 : vector<8x32xf32>
    %cst_41 = arith.constant dense<0.000000e+00> : vector<8x4xf32>
    %87 = tpu.matmul %86, %57, %cst_41 {dimension_numbers = #tpu.dot_dimension_numbers<[1], [0], [0], [1], [0, 0, 1, 1], [], []>} : vector<8x32xf32>, vector<32x4xf32>, vector<8x4xf32> -> vector<8x4xf32>
    %cst_42 = arith.constant 1.250000e-01 : f32
    %88 = vector.broadcast %cst_42 : f32 to vector<8x4xf32>
    %89 = arith.mulf %87, %88 : vector<8x4xf32>
    %cst_43 = arith.constant 9.99999997E-7 : f32
    %90 = vector.broadcast %cst_43 : f32 to vector<8x4xf32>
    %91 = arith.addf %89, %90 : vector<8x4xf32>
    %92 = math.rsqrt %91 : vector<8x4xf32>
    %cst_44 = arith.constant dense<0.000000e+00> : vector<8x32xf32>
    %93 = tpu.matmul %92, %70, %cst_44 {dimension_numbers = #tpu.dot_dimension_numbers<[1], [0], [0], [1], [0, 0, 1, 1], [], []>} : vector<8x4xf32>, vector<4x32xf32>, vector<8x32xf32> -> vector<8x32xf32>
    %94 = arith.mulf %39, %93 : vector<8x32xf32>
    %c0_45 = arith.constant 0 : index
    %c0_46 = arith.constant 0 : index
    %95 = vector.load %arg12[%c0_45, %c0_46] : memref<1x32xf32, #tpu.memory_space<vmem>>, vector<1x32xf32>
    %96 = vector.broadcast %95 : vector<1x32xf32> to vector<8x32xf32>
    %97 = arith.mulf %94, %96 : vector<8x32xf32>
    %c0_47 = arith.constant 0 : index
    %c0_48 = arith.constant 0 : index
    %c0_49 = arith.constant 0 : index
    %98 = vector.load %arg14[%c0_47, %c0_48, %c0_49] : memref<1x8x32xf32, #tpu.memory_space<vmem>>, vector<1x8x32xf32>
    %99 = vector.shape_cast %98 : vector<1x8x32xf32> to vector<8x32xf32>
    %100 = vector.shape_cast %97 : vector<8x32xf32> to vector<1x8x32xf32>
    tpu.vector_store %arg14[%c0_47, %c0_48, %c0_49], %100 {strides = array<i32>} : memref<1x8x32xf32, #tpu.memory_space<vmem>>, vector<1x8x32xf32>,
    %c0_50 = arith.constant 0 : index
    %c0_51 = arith.constant 0 : index
    %c0_52 = arith.constant 0 : index
    %101 = vector.load %arg15[%c0_50, %c0_51, %c0_52] : memref<1x8x32xf32, #tpu.memory_space<vmem>>, vector<1x8x32xf32>
    %102 = vector.shape_cast %101 : vector<1x8x32xf32> to vector<8x32xf32>
    %103 = vector.shape_cast %44 : vector<8x32xf32> to vector<1x8x32xf32>
    tpu.vector_store %arg15[%c0_50, %c0_51, %c0_52], %103 {strides = array<i32>} : memref<1x8x32xf32, #tpu.memory_space<vmem>>, vector<1x8x32xf32>,
    return
  }
  func.func @transform_0(%arg0: i32, %arg1: i32) -> (i32, i32, i32) {
    %c0_i32 = arith.constant 0 : i32
    %c0_i32_0 = arith.constant 0 : i32
    return %arg0, %arg1, %c0_i32 : i32, i32, i32
  }
  func.func @transform_1(%arg0: i32, %arg1: i32) -> (i32, i32, i32) {
    %c0_i32 = arith.constant 0 : i32
    %c0_i32_0 = arith.constant 0 : i32
    %c0_i32_1 = arith.constant 0 : i32
    return %arg0, %c0_i32, %c0_i32_0 : i32, i32, i32
  }
  func.func @transform_2(%arg0: i32, %arg1: i32) -> (i32, i32, i32) {
    %c0_i32 = arith.constant 0 : i32
    %c0_i32_0 = arith.constant 0 : i32
    %c0_i32_1 = arith.constant 0 : i32
    return %arg0, %c0_i32, %c0_i32_0 : i32, i32, i32
  }
  func.func @transform_3(%arg0: i32, %arg1: i32) -> (i32, i32) {
    %c0_i32 = arith.constant 0 : i32
    %c0_i32_0 = arith.constant 0 : i32
    %c0_i32_1 = arith.constant 0 : i32
    return %c0_i32, %c0_i32_0 : i32, i32
  }
  func.func @transform_4(%arg0: i32, %arg1: i32) -> (i32, i32) {
    %c0_i32 = arith.constant 0 : i32
    %c0_i32_0 = arith.constant 0 : i32
    %c0_i32_1 = arith.constant 0 : i32
    return %c0_i32, %c0_i32_0 : i32, i32
  }
  func.func @transform_5(%arg0: i32, %arg1: i32) -> (i32, i32) {
    %c0_i32 = arith.constant 0 : i32
    %c0_i32_0 = arith.constant 0 : i32
    %c0_i32_1 = arith.constant 0 : i32
    return %c0_i32, %c0_i32_0 : i32, i32
  }
  func.func @transform_6(%arg0: i32, %arg1: i32) -> (i32, i32) {
    %c0_i32 = arith.constant 0 : i32
    %c0_i32_0 = arith.constant 0 : i32
    %c0_i32_1 = arith.constant 0 : i32
    return %c0_i32, %c0_i32_0 : i32, i32
  }
  func.func @transform_7(%arg0: i32, %arg1: i32) -> (i32, i32) {
    %c0_i32 = arith.constant 0 : i32
    %c0_i32_0 = arith.constant 0 : i32
    %c0_i32_1 = arith.constant 0 : i32
    return %c0_i32, %c0_i32_0 : i32, i32
  }
  func.func @transform_8(%arg0: i32, %arg1: i32) -> (i32, i32) {
    %c0_i32 = arith.constant 0 : i32
    %c0_i32_0 = arith.constant 0 : i32
    %c0_i32_1 = arith.constant 0 : i32
    return %c0_i32, %c0_i32_0 : i32, i32
  }
  func.func @transform_9(%arg0: i32, %arg1: i32) -> (i32, i32) {
    %c0_i32 = arith.constant 0 : i32
    %c0_i32_0 = arith.constant 0 : i32
    %c0_i32_1 = arith.constant 0 : i32
    return %c0_i32, %c0_i32_0 : i32, i32
  }
  func.func @transform_10(%arg0: i32, %arg1: i32) -> (i32, i32) {
    %c0_i32 = arith.constant 0 : i32
    %c0_i32_0 = arith.constant 0 : i32
    %c0_i32_1 = arith.constant 0 : i32
    return %c0_i32, %c0_i32_0 : i32, i32
  }
  func.func @transform_11(%arg0: i32, %arg1: i32) -> (i32, i32, i32) {
    %c0_i32 = arith.constant 0 : i32
    %c0_i32_0 = arith.constant 0 : i32
    return %arg0, %arg1, %c0_i32 : i32, i32, i32
  }
  func.func @transform_12(%arg0: i32, %arg1: i32) -> (i32, i32, i32) {
    %c0_i32 = arith.constant 0 : i32
    %c0_i32_0 = arith.constant 0 : i32
    return %arg0, %arg1, %c0_i32 : i32, i32, i32
  }
  func.func @transform_13(%arg0: i32, %arg1: i32) -> (i32, i32, i32) {
    %c0_i32 = arith.constant 0 : i32
    %c0_i32_0 = arith.constant 0 : i32
    return %arg0, %arg1, %c0_i32 : i32, i32, i32
  }
}

module attributes {stable_mosaic.version = 11 : i64} {
  func.func @flash_attn_kernel(%arg0: i32, %arg1: i32, %arg2: i32, %arg3: memref<1x8x8xf32, #tpu.memory_space<vmem>>, %arg4: memref<1x8x8xf32, #tpu.memory_space<vmem>>, %arg5: memref<1x8x8xf32, #tpu.memory_space<vmem>>, %arg6: memref<1x8x8xf32, #tpu.memory_space<vmem>>, %arg7: memref<8x1xf32, #tpu.memory_space<vmem>>, %arg8: memref<8x1xf32, #tpu.memory_space<vmem>>, %arg9: memref<8x8xf32, #tpu.memory_space<vmem>>) attributes {dimension_semantics = [#tpu.dimension_semantics<parallel>, #tpu.dimension_semantics<parallel>, #tpu.dimension_semantics<arbitrary>], iteration_bounds = array<i64: 8, 1, 1>, scalar_prefetch = 0 : i64, scratch_operands = 3 : i64, tpu.core_type = #tpu.core_type<tc>, window_params = [{transform_indices = @transform_0, window_bounds = array<i64: 1, 8, 8>}, {transform_indices = @transform_1, window_bounds = array<i64: 1, 8, 8>}, {transform_indices = @transform_2, window_bounds = array<i64: 1, 8, 8>}, {transform_indices = @transform_3, window_bounds = array<i64: 1, 8, 8>}]} {
    %c0_i32 = arith.constant 0 : i32
    %0 = arith.cmpi eq, %arg2, %c0_i32 : i32
    %1 = arith.extui %0 : i1 to i32
    %c0_i32_0 = arith.constant 0 : i32
    %2 = arith.cmpi ne, %1, %c0_i32_0 : i32
    scf.if %2 {
      %cst_27 = arith.constant 0xFF800000 : f32
      %37 = vector.broadcast %cst_27 : f32 to vector<8x1xf32>
      %c0_28 = arith.constant 0 : index
      %c0_29 = arith.constant 0 : index
      %38 = vector.load %arg7[%c0_28, %c0_29] : memref<8x1xf32, #tpu.memory_space<vmem>>, vector<8x1xf32>
      tpu.vector_store %arg7[%c0_28, %c0_29], %37 {strides = array<i32>} : memref<8x1xf32, #tpu.memory_space<vmem>>, vector<8x1xf32>,
      %cst_30 = arith.constant 0.000000e+00 : f32
      %39 = vector.broadcast %cst_30 : f32 to vector<8x1xf32>
      %c0_31 = arith.constant 0 : index
      %c0_32 = arith.constant 0 : index
      %40 = vector.load %arg8[%c0_31, %c0_32] : memref<8x1xf32, #tpu.memory_space<vmem>>, vector<8x1xf32>
      tpu.vector_store %arg8[%c0_31, %c0_32], %39 {strides = array<i32>} : memref<8x1xf32, #tpu.memory_space<vmem>>, vector<8x1xf32>,
      %cst_33 = arith.constant 0.000000e+00 : f32
      %41 = vector.broadcast %cst_33 : f32 to vector<8x8xf32>
      %c0_34 = arith.constant 0 : index
      %c0_35 = arith.constant 0 : index
      %42 = vector.load %arg9[%c0_34, %c0_35] : memref<8x8xf32, #tpu.memory_space<vmem>>, vector<8x8xf32>
      tpu.vector_store %arg9[%c0_34, %c0_35], %41 {strides = array<i32>} : memref<8x8xf32, #tpu.memory_space<vmem>>, vector<8x8xf32>,
    } else {
    }
    %c0 = arith.constant 0 : index
    %c0_1 = arith.constant 0 : index
    %c0_2 = arith.constant 0 : index
    %3 = vector.load %arg3[%c0, %c0_1, %c0_2] : memref<1x8x8xf32, #tpu.memory_space<vmem>>, vector<1x8x8xf32>
    %4 = vector.shape_cast %3 : vector<1x8x8xf32> to vector<8x8xf32>
    %cst = arith.constant 0.353553385 : f32
    %5 = vector.broadcast %cst : f32 to vector<8x8xf32>
    %6 = arith.mulf %4, %5 : vector<8x8xf32>
    %c0_3 = arith.constant 0 : index
    %c0_4 = arith.constant 0 : index
    %c0_5 = arith.constant 0 : index
    %7 = vector.load %arg4[%c0_3, %c0_4, %c0_5] : memref<1x8x8xf32, #tpu.memory_space<vmem>>, vector<1x8x8xf32>
    %8 = vector.shape_cast %7 : vector<1x8x8xf32> to vector<8x8xf32>
    %c0_6 = arith.constant 0 : index
    %c0_7 = arith.constant 0 : index
    %c0_8 = arith.constant 0 : index
    %9 = vector.load %arg5[%c0_6, %c0_7, %c0_8] : memref<1x8x8xf32, #tpu.memory_space<vmem>>, vector<1x8x8xf32>
    %10 = vector.shape_cast %9 : vector<1x8x8xf32> to vector<8x8xf32>
    %cst_9 = arith.constant dense<0.000000e+00> : vector<8x8xf32>
    %11 = tpu.matmul %6, %8, %cst_9 {dimension_numbers = #tpu.dot_dimension_numbers<[1], [1], [0], [0], [0, 0, 1, 0], [], []>} : vector<8x8xf32>, vector<8x8xf32>, vector<8x8xf32> -> vector<8x8xf32>
    %c0_10 = arith.constant 0 : index
    %c0_11 = arith.constant 0 : index
    %12 = vector.load %arg7[%c0_10, %c0_11] : memref<8x1xf32, #tpu.memory_space<vmem>>, vector<8x1xf32>
    %cst_12 = arith.constant dense<0xFF800000> : vector<8xf32>
    %13 = vector.multi_reduction <maximumf>, %11, %cst_12 [1] : vector<8x8xf32> to vector<8xf32>
    %14 = vector.shape_cast %13 : vector<8xf32> to vector<8x1xf32>
    %15 = arith.maximumf %12, %14 : vector<8x1xf32>
    %16 = arith.subf %12, %15 : vector<8x1xf32>
    %17 = math.exp %16 : vector<8x1xf32>
    %18 = vector.broadcast %15 : vector<8x1xf32> to vector<8x8xf32>
    %19 = arith.subf %11, %18 : vector<8x8xf32>
    %20 = math.exp %19 : vector<8x8xf32>
    %c0_13 = arith.constant 0 : index
    %c0_14 = arith.constant 0 : index
    %21 = vector.load %arg8[%c0_13, %c0_14] : memref<8x1xf32, #tpu.memory_space<vmem>>, vector<8x1xf32>
    %22 = arith.mulf %17, %21 : vector<8x1xf32>
    %cst_15 = arith.constant dense<0.000000e+00> : vector<8xf32>
    %23 = vector.multi_reduction <add>, %20, %cst_15 [1] : vector<8x8xf32> to vector<8xf32>
    %24 = vector.shape_cast %23 : vector<8xf32> to vector<8x1xf32>
    %25 = arith.addf %22, %24 : vector<8x1xf32>
    %c0_16 = arith.constant 0 : index
    %c0_17 = arith.constant 0 : index
    %26 = vector.load %arg8[%c0_16, %c0_17] : memref<8x1xf32, #tpu.memory_space<vmem>>, vector<8x1xf32>
    tpu.vector_store %arg8[%c0_16, %c0_17], %25 {strides = array<i32>} : memref<8x1xf32, #tpu.memory_space<vmem>>, vector<8x1xf32>,
    %c0_18 = arith.constant 0 : index
    %c0_19 = arith.constant 0 : index
    %27 = vector.load %arg9[%c0_18, %c0_19] : memref<8x8xf32, #tpu.memory_space<vmem>>, vector<8x8xf32>
    %28 = vector.broadcast %17 : vector<8x1xf32> to vector<8x8xf32>
    %29 = arith.mulf %28, %27 : vector<8x8xf32>
    %cst_20 = arith.constant dense<0.000000e+00> : vector<8x8xf32>
    %30 = tpu.matmul %20, %10, %cst_20 {dimension_numbers = #tpu.dot_dimension_numbers<[1], [0], [0], [1], [0, 0, 1, 1], [], []>} : vector<8x8xf32>, vector<8x8xf32>, vector<8x8xf32> -> vector<8x8xf32>
    %31 = arith.addf %29, %30 : vector<8x8xf32>
    %c0_21 = arith.constant 0 : index
    %c0_22 = arith.constant 0 : index
    %32 = vector.load %arg9[%c0_21, %c0_22] : memref<8x8xf32, #tpu.memory_space<vmem>>, vector<8x8xf32>
    tpu.vector_store %arg9[%c0_21, %c0_22], %31 {strides = array<i32>} : memref<8x8xf32, #tpu.memory_space<vmem>>, vector<8x8xf32>,
    %c0_23 = arith.constant 0 : index
    %c0_24 = arith.constant 0 : index
    %33 = vector.load %arg7[%c0_23, %c0_24] : memref<8x1xf32, #tpu.memory_space<vmem>>, vector<8x1xf32>
    tpu.vector_store %arg7[%c0_23, %c0_24], %15 {strides = array<i32>} : memref<8x1xf32, #tpu.memory_space<vmem>>, vector<8x1xf32>,
    %c0_i32_25 = arith.constant 0 : i32
    %34 = arith.cmpi eq, %arg2, %c0_i32_25 : i32
    %35 = arith.extui %34 : i1 to i32
    %c0_i32_26 = arith.constant 0 : i32
    %36 = arith.cmpi ne, %35, %c0_i32_26 : i32
    scf.if %36 {
      %c0_27 = arith.constant 0 : index
      %c0_28 = arith.constant 0 : index
      %37 = vector.load %arg9[%c0_27, %c0_28] : memref<8x8xf32, #tpu.memory_space<vmem>>, vector<8x8xf32>
      %c0_29 = arith.constant 0 : index
      %c0_30 = arith.constant 0 : index
      %38 = vector.load %arg8[%c0_29, %c0_30] : memref<8x1xf32, #tpu.memory_space<vmem>>, vector<8x1xf32>
      %39 = vector.broadcast %38 : vector<8x1xf32> to vector<8x8xf32>
      %40 = arith.divf %37, %39 : vector<8x8xf32>
      %c0_31 = arith.constant 0 : index
      %c0_32 = arith.constant 0 : index
      %c0_33 = arith.constant 0 : index
      %41 = vector.load %arg6[%c0_31, %c0_32, %c0_33] : memref<1x8x8xf32, #tpu.memory_space<vmem>>, vector<1x8x8xf32>
      %42 = vector.shape_cast %41 : vector<1x8x8xf32> to vector<8x8xf32>
      %43 = vector.shape_cast %40 : vector<8x8xf32> to vector<1x8x8xf32>
      tpu.vector_store %arg6[%c0_31, %c0_32, %c0_33], %43 {strides = array<i32>} : memref<1x8x8xf32, #tpu.memory_space<vmem>>, vector<1x8x8xf32>,
    } else {
    }
    return
  }
  func.func @transform_0(%arg0: i32, %arg1: i32, %arg2: i32) -> (i32, i32, i32) {
    %c0_i32 = arith.constant 0 : i32
    %c0_i32_0 = arith.constant 0 : i32
    return %arg0, %arg1, %c0_i32 : i32, i32, i32
  }
  func.func @transform_1(%arg0: i32, %arg1: i32, %arg2: i32) -> (i32, i32, i32) {
    %c0_i32 = arith.constant 0 : i32
    %c0_i32_0 = arith.constant 0 : i32
    return %arg0, %arg2, %c0_i32 : i32, i32, i32
  }
  func.func @transform_2(%arg0: i32, %arg1: i32, %arg2: i32) -> (i32, i32, i32) {
    %c0_i32 = arith.constant 0 : i32
    %c0_i32_0 = arith.constant 0 : i32
    return %arg0, %arg2, %c0_i32 : i32, i32, i32
  }
  func.func @transform_3(%arg0: i32, %arg1: i32, %arg2: i32) -> (i32, i32, i32) {
    %c0_i32 = arith.constant 0 : i32
    %c0_i32_0 = arith.constant 0 : i32
    return %arg0, %arg1, %c0_i32 : i32, i32, i32
  }
}

module attributes {stable_mosaic.version = 11 : i64} {
  func.func @attn_out_mlp_kernel(%arg0: i32, %arg1: i32, %arg2: memref<1x8x32xf32, #tpu.memory_space<vmem>>, %arg3: memref<1x8x32xf32, #tpu.memory_space<vmem>>, %arg4: memref<1x1x32xf32, #tpu.memory_space<vmem>>, %arg5: memref<1x1x32xf32, #tpu.memory_space<vmem>>, %arg6: memref<1x1x32xf32, #tpu.memory_space<vmem>>, %arg7: memref<1x1x32xf32, #tpu.memory_space<vmem>>, %arg8: memref<32x32xf32, #tpu.memory_space<vmem>>, %arg9: memref<1x32xf32, #tpu.memory_space<vmem>>, %arg10: memref<32x128xf32, #tpu.memory_space<vmem>>, %arg11: memref<1x128xf32, #tpu.memory_space<vmem>>, %arg12: memref<128x32xf32, #tpu.memory_space<vmem>>, %arg13: memref<1x32xf32, #tpu.memory_space<vmem>>, %arg14: memref<1x8x32xf32, #tpu.memory_space<vmem>>) attributes {dimension_semantics = [#tpu.dimension_semantics<parallel>, #tpu.dimension_semantics<parallel>], iteration_bounds = array<i64: 2, 1>, scalar_prefetch = 0 : i64, scratch_operands = 0 : i64, tpu.core_type = #tpu.core_type<tc>, window_params = [{transform_indices = @transform_0, window_bounds = array<i64: 1, 8, 32>}, {transform_indices = @transform_1, window_bounds = array<i64: 1, 8, 32>}, {transform_indices = @transform_2, window_bounds = array<i64: 1, 1, 32>}, {transform_indices = @transform_3, window_bounds = array<i64: 1, 1, 32>}, {transform_indices = @transform_4, window_bounds = array<i64: 1, 1, 32>}, {transform_indices = @transform_5, window_bounds = array<i64: 1, 1, 32>}, {pipeline_mode = #tpu.pipeline_mode<synchronous>, transform_indices = @transform_6, window_bounds = array<i64: 32, 32>}, {pipeline_mode = #tpu.pipeline_mode<synchronous>, transform_indices = @transform_7, window_bounds = array<i64: 1, 32>}, {pipeline_mode = #tpu.pipeline_mode<synchronous>, transform_indices = @transform_8, window_bounds = array<i64: 32, 128>}, {pipeline_mode = #tpu.pipeline_mode<synchronous>, transform_indices = @transform_9, window_bounds = array<i64: 1, 128>}, {pipeline_mode = #tpu.pipeline_mode<synchronous>, transform_indices = @transform_10, window_bounds = array<i64: 128, 32>}, {pipeline_mode = #tpu.pipeline_mode<synchronous>, transform_indices = @transform_11, window_bounds = array<i64: 1, 32>}, {transform_indices = @transform_12, window_bounds = array<i64: 1, 8, 32>}]} {
    %c0 = arith.constant 0 : index
    %c0_0 = arith.constant 0 : index
    %c0_1 = arith.constant 0 : index
    %0 = vector.load %arg2[%c0, %c0_0, %c0_1] : memref<1x8x32xf32, #tpu.memory_space<vmem>>, vector<1x8x32xf32>
    %1 = vector.shape_cast %0 : vector<1x8x32xf32> to vector<8x32xf32>
    %c0_2 = arith.constant 0 : index
    %c0_3 = arith.constant 0 : index
    %c0_4 = arith.constant 0 : index
    %2 = vector.load %arg3[%c0_2, %c0_3, %c0_4] : memref<1x8x32xf32, #tpu.memory_space<vmem>>, vector<1x8x32xf32>
    %3 = vector.shape_cast %2 : vector<1x8x32xf32> to vector<8x32xf32>
    %c0_5 = arith.constant 0 : index
    %c0_6 = arith.constant 0 : index
    %c0_7 = arith.constant 0 : index
    %4 = vector.load %arg4[%c0_5, %c0_6, %c0_7] : memref<1x1x32xf32, #tpu.memory_space<vmem>>, vector<1x1x32xf32>
    %5 = vector.shape_cast %4 : vector<1x1x32xf32> to vector<1x32xf32>
    %c0_8 = arith.constant 0 : index
    %c0_9 = arith.constant 0 : index
    %c0_10 = arith.constant 0 : index
    %6 = vector.load %arg5[%c0_8, %c0_9, %c0_10] : memref<1x1x32xf32, #tpu.memory_space<vmem>>, vector<1x1x32xf32>
    %7 = vector.shape_cast %6 : vector<1x1x32xf32> to vector<1x32xf32>
    %c0_11 = arith.constant 0 : index
    %c0_12 = arith.constant 0 : index
    %c0_13 = arith.constant 0 : index
    %8 = vector.load %arg6[%c0_11, %c0_12, %c0_13] : memref<1x1x32xf32, #tpu.memory_space<vmem>>, vector<1x1x32xf32>
    %9 = vector.shape_cast %8 : vector<1x1x32xf32> to vector<1x32xf32>
    %c0_14 = arith.constant 0 : index
    %c0_15 = arith.constant 0 : index
    %c0_16 = arith.constant 0 : index
    %10 = vector.load %arg7[%c0_14, %c0_15, %c0_16] : memref<1x1x32xf32, #tpu.memory_space<vmem>>, vector<1x1x32xf32>
    %11 = vector.shape_cast %10 : vector<1x1x32xf32> to vector<1x32xf32>
    %c0_17 = arith.constant 0 : index
    %c0_18 = arith.constant 0 : index
    %12 = vector.load %arg8[%c0_17, %c0_18] : memref<32x32xf32, #tpu.memory_space<vmem>>, vector<32x32xf32>
    %cst = arith.constant dense<0.000000e+00> : vector<8x32xf32>
    %13 = tpu.matmul %1, %12, %cst {dimension_numbers = #tpu.dot_dimension_numbers<[1], [0], [0], [1], [0, 0, 1, 1], [], []>} : vector<8x32xf32>, vector<32x32xf32>, vector<8x32xf32> -> vector<8x32xf32>
    %c0_19 = arith.constant 0 : index
    %c0_20 = arith.constant 0 : index
    %14 = vector.load %arg9[%c0_19, %c0_20] : memref<1x32xf32, #tpu.memory_space<vmem>>, vector<1x32xf32>
    %15 = vector.broadcast %14 : vector<1x32xf32> to vector<8x32xf32>
    %16 = arith.addf %13, %15 : vector<8x32xf32>
    %17 = vector.broadcast %5 : vector<1x32xf32> to vector<8x32xf32>
    %18 = arith.mulf %16, %17 : vector<8x32xf32>
    %19 = arith.addf %3, %18 : vector<8x32xf32>
    %cst_21 = arith.constant dense<0.000000e+00> : vector<8xf32>
    %20 = vector.multi_reduction <add>, %19, %cst_21 [1] : vector<8x32xf32> to vector<8xf32>
    %21 = vector.shape_cast %20 : vector<8xf32> to vector<8x1xf32>
    %cst_22 = arith.constant 3.200000e+01 : f32
    %22 = vector.broadcast %cst_22 : f32 to vector<8x1xf32>
    %23 = arith.divf %21, %22 : vector<8x1xf32>
    %24 = arith.mulf %19, %19 : vector<8x32xf32>
    %cst_23 = arith.constant dense<0.000000e+00> : vector<8xf32>
    %25 = vector.multi_reduction <add>, %24, %cst_23 [1] : vector<8x32xf32> to vector<8xf32>
    %26 = vector.shape_cast %25 : vector<8xf32> to vector<8x1xf32>
    %cst_24 = arith.constant 3.200000e+01 : f32
    %27 = vector.broadcast %cst_24 : f32 to vector<8x1xf32>
    %28 = arith.divf %26, %27 : vector<8x1xf32>
    %29 = vector.broadcast %23 : vector<8x1xf32> to vector<8x32xf32>
    %30 = arith.subf %19, %29 : vector<8x32xf32>
    %31 = arith.mulf %23, %23 : vector<8x1xf32>
    %32 = arith.subf %28, %31 : vector<8x1xf32>
    %cst_25 = arith.constant 9.99999997E-7 : f32
    %33 = vector.broadcast %cst_25 : f32 to vector<8x1xf32>
    %34 = arith.addf %32, %33 : vector<8x1xf32>
    %35 = math.rsqrt %34 : vector<8x1xf32>
    %36 = vector.broadcast %35 : vector<8x1xf32> to vector<8x32xf32>
    %37 = arith.mulf %30, %36 : vector<8x32xf32>
    %cst_26 = arith.constant 1.000000e+00 : f32
    %38 = vector.broadcast %cst_26 : f32 to vector<1x32xf32>
    %39 = arith.addf %38, %7 : vector<1x32xf32>
    %40 = vector.broadcast %39 : vector<1x32xf32> to vector<8x32xf32>
    %41 = arith.mulf %37, %40 : vector<8x32xf32>
    %42 = vector.broadcast %9 : vector<1x32xf32> to vector<8x32xf32>
    %43 = arith.addf %41, %42 : vector<8x32xf32>
    %c0_27 = arith.constant 0 : index
    %c0_28 = arith.constant 0 : index
    %44 = vector.load %arg10[%c0_27, %c0_28] : memref<32x128xf32, #tpu.memory_space<vmem>>, vector<32x128xf32>
    %cst_29 = arith.constant dense<0.000000e+00> : vector<8x128xf32>
    %45 = tpu.matmul %43, %44, %cst_29 {dimension_numbers = #tpu.dot_dimension_numbers<[1], [0], [0], [1], [0, 0, 1, 1], [], []>} : vector<8x32xf32>, vector<32x128xf32>, vector<8x128xf32> -> vector<8x128xf32>
    %c0_30 = arith.constant 0 : index
    %c0_31 = arith.constant 0 : index
    %46 = vector.load %arg11[%c0_30, %c0_31] : memref<1x128xf32, #tpu.memory_space<vmem>>, vector<1x128xf32>
    %47 = vector.broadcast %46 : vector<1x128xf32> to vector<8x128xf32>
    %48 = arith.addf %45, %47 : vector<8x128xf32>
    %49 = arith.mulf %48, %48 : vector<8x128xf32>
    %50 = arith.mulf %48, %49 : vector<8x128xf32>
    %cst_32 = arith.constant 4.471500e-02 : f32
    %51 = vector.broadcast %cst_32 : f32 to vector<8x128xf32>
    %52 = arith.mulf %51, %50 : vector<8x128xf32>
    %53 = arith.addf %48, %52 : vector<8x128xf32>
    %cst_33 = arith.constant 0.797884583 : f32
    %54 = vector.broadcast %cst_33 : f32 to vector<8x128xf32>
    %55 = arith.mulf %54, %53 : vector<8x128xf32>
    %56 = math.tanh %55 : vector<8x128xf32>
    %cst_34 = arith.constant 1.000000e+00 : f32
    %57 = vector.broadcast %cst_34 : f32 to vector<8x128xf32>
    %58 = arith.addf %57, %56 : vector<8x128xf32>
    %cst_35 = arith.constant 5.000000e-01 : f32
    %59 = vector.broadcast %cst_35 : f32 to vector<8x128xf32>
    %60 = arith.mulf %59, %58 : vector<8x128xf32>
    %61 = arith.mulf %48, %60 : vector<8x128xf32>
    %c0_36 = arith.constant 0 : index
    %c0_37 = arith.constant 0 : index
    %62 = vector.load %arg12[%c0_36, %c0_37] : memref<128x32xf32, #tpu.memory_space<vmem>>, vector<128x32xf32>
    %cst_38 = arith.constant dense<0.000000e+00> : vector<8x32xf32>
    %63 = tpu.matmul %61, %62, %cst_38 {dimension_numbers = #tpu.dot_dimension_numbers<[1], [0], [0], [1], [0, 0, 1, 1], [], []>} : vector<8x128xf32>, vector<128x32xf32>, vector<8x32xf32> -> vector<8x32xf32>
    %c0_39 = arith.constant 0 : index
    %c0_40 = arith.constant 0 : index
    %64 = vector.load %arg13[%c0_39, %c0_40] : memref<1x32xf32, #tpu.memory_space<vmem>>, vector<1x32xf32>
    %65 = vector.broadcast %64 : vector<1x32xf32> to vector<8x32xf32>
    %66 = arith.addf %63, %65 : vector<8x32xf32>
    %67 = vector.broadcast %11 : vector<1x32xf32> to vector<8x32xf32>
    %68 = arith.mulf %66, %67 : vector<8x32xf32>
    %69 = arith.addf %19, %68 : vector<8x32xf32>
    %c0_41 = arith.constant 0 : index
    %c0_42 = arith.constant 0 : index
    %c0_43 = arith.constant 0 : index
    %70 = vector.load %arg14[%c0_41, %c0_42, %c0_43] : memref<1x8x32xf32, #tpu.memory_space<vmem>>, vector<1x8x32xf32>
    %71 = vector.shape_cast %70 : vector<1x8x32xf32> to vector<8x32xf32>
    %72 = vector.shape_cast %69 : vector<8x32xf32> to vector<1x8x32xf32>
    tpu.vector_store %arg14[%c0_41, %c0_42, %c0_43], %72 {strides = array<i32>} : memref<1x8x32xf32, #tpu.memory_space<vmem>>, vector<1x8x32xf32>,
    return
  }
  func.func @transform_0(%arg0: i32, %arg1: i32) -> (i32, i32, i32) {
    %c0_i32 = arith.constant 0 : i32
    %c0_i32_0 = arith.constant 0 : i32
    return %arg0, %arg1, %c0_i32 : i32, i32, i32
  }
  func.func @transform_1(%arg0: i32, %arg1: i32) -> (i32, i32, i32) {
    %c0_i32 = arith.constant 0 : i32
    %c0_i32_0 = arith.constant 0 : i32
    return %arg0, %arg1, %c0_i32 : i32, i32, i32
  }
  func.func @transform_2(%arg0: i32, %arg1: i32) -> (i32, i32, i32) {
    %c0_i32 = arith.constant 0 : i32
    %c0_i32_0 = arith.constant 0 : i32
    %c0_i32_1 = arith.constant 0 : i32
    return %arg0, %c0_i32, %c0_i32_0 : i32, i32, i32
  }
  func.func @transform_3(%arg0: i32, %arg1: i32) -> (i32, i32, i32) {
    %c0_i32 = arith.constant 0 : i32
    %c0_i32_0 = arith.constant 0 : i32
    %c0_i32_1 = arith.constant 0 : i32
    return %arg0, %c0_i32, %c0_i32_0 : i32, i32, i32
  }
  func.func @transform_4(%arg0: i32, %arg1: i32) -> (i32, i32, i32) {
    %c0_i32 = arith.constant 0 : i32
    %c0_i32_0 = arith.constant 0 : i32
    %c0_i32_1 = arith.constant 0 : i32
    return %arg0, %c0_i32, %c0_i32_0 : i32, i32, i32
  }
  func.func @transform_5(%arg0: i32, %arg1: i32) -> (i32, i32, i32) {
    %c0_i32 = arith.constant 0 : i32
    %c0_i32_0 = arith.constant 0 : i32
    %c0_i32_1 = arith.constant 0 : i32
    return %arg0, %c0_i32, %c0_i32_0 : i32, i32, i32
  }
  func.func @transform_6(%arg0: i32, %arg1: i32) -> (i32, i32) {
    %c0_i32 = arith.constant 0 : i32
    %c0_i32_0 = arith.constant 0 : i32
    %c0_i32_1 = arith.constant 0 : i32
    return %c0_i32, %c0_i32_0 : i32, i32
  }
  func.func @transform_7(%arg0: i32, %arg1: i32) -> (i32, i32) {
    %c0_i32 = arith.constant 0 : i32
    %c0_i32_0 = arith.constant 0 : i32
    %c0_i32_1 = arith.constant 0 : i32
    return %c0_i32, %c0_i32_0 : i32, i32
  }
  func.func @transform_8(%arg0: i32, %arg1: i32) -> (i32, i32) {
    %c0_i32 = arith.constant 0 : i32
    %c0_i32_0 = arith.constant 0 : i32
    %c0_i32_1 = arith.constant 0 : i32
    return %c0_i32, %c0_i32_0 : i32, i32
  }
  func.func @transform_9(%arg0: i32, %arg1: i32) -> (i32, i32) {
    %c0_i32 = arith.constant 0 : i32
    %c0_i32_0 = arith.constant 0 : i32
    %c0_i32_1 = arith.constant 0 : i32
    return %c0_i32, %c0_i32_0 : i32, i32
  }
  func.func @transform_10(%arg0: i32, %arg1: i32) -> (i32, i32) {
    %c0_i32 = arith.constant 0 : i32
    %c0_i32_0 = arith.constant 0 : i32
    %c0_i32_1 = arith.constant 0 : i32
    return %c0_i32, %c0_i32_0 : i32, i32
  }
  func.func @transform_11(%arg0: i32, %arg1: i32) -> (i32, i32) {
    %c0_i32 = arith.constant 0 : i32
    %c0_i32_0 = arith.constant 0 : i32
    %c0_i32_1 = arith.constant 0 : i32
    return %c0_i32, %c0_i32_0 : i32, i32
  }
  func.func @transform_12(%arg0: i32, %arg1: i32) -> (i32, i32, i32) {
    %c0_i32 = arith.constant 0 : i32
    %c0_i32_0 = arith.constant 0 : i32
    return %arg0, %arg1, %c0_i32 : i32, i32, i32
  }
}

</mosaic_0001>

<llo_original>
// kernel: tile.13
$region0: #{tile.13}
  #allocation0 [shape = 's32[1]{0}', space=sflag, size = 0x4, scoped, tag = 'scoped memory for tile.13']
  %s0 = inlined_call_operand.vmem [shape: f32[8], index: 0, kind: input, shape index: {}]
  %s1 = inlined_call_operand.vmem [shape: f32[4,8], index: 1, kind: output, shape index: {}]
  // Predicated region
  $region2: #{tile.13} parent=0 // pred_check
    _
  $region3: #{tile.13} parent=0 // pred_check_branch
    %3 = sbr.rel (0) target = $region5
  $region4: #{tile.13} parent=0 // pred_region
    _
  $region5: #{tile.13} parent=0 // pred_fallthru
    _
  %v4 = vld [vmem:[%s0] ss:$0 sm:$0xff]
  %5 = vst [vmem:[%s1] sm:$0xf] %v4

// kernel: tile.14
$region0: #{tile.14}
  %s0 = inlined_call_operand.vmem [shape: f32[4,8], index: 0, kind: input, shape index: {}]
  %s1 = inlined_call_operand.vmem [shape: f32[1,32], index: 1, kind: output, shape index: {}]
  $region1: #{tile.14} parent=0
    #allocation0 [shape = 'u8[4096]{0}', space=vmem, size = 0x1000, scoped, tag = 'scoped mem for output reshape']
    #allocation1 [shape = 'u8[4096]{0}', space=vmem, size = 0x1000, scoped, tag = 'scoped mem for input reshape']
    %s3 = ssub.s32 16, 1
    %v4 = vld [vmem:[%s0] sm:%s3]
    %5 = vst [vmem:[#allocation1] sm:%s3] %v4
    %v6 = vld [vmem:[#allocation1] sm:$0x1]
    %vm7 = vcmask 64512
    %8 = vst.msk [vmem:[#allocation0] sm:$0x1] %vm7, %v6
    %s9 = scalar_lea.vmem [#allocation1], 3
    %v10 = vld [vmem:[%s9] sm:$0x1]
    %11 = vrot.lane.b32.xlu0 %v10, 24
    %v12 = vpop.permute.xlu0 %11
    %vm13 = vcmask 261312
    %14 = vst.msk [vmem:[#allocation0] sm:$0x1] %vm13, %v12
    %s15 = scalar_lea.vmem [#allocation1], 2
    %v16 = vld [vmem:[%s15] sm:$0x1]
    %17 = vrot.lane.b32.xlu0 %v16, 16
    %v18 = vpop.permute.xlu0 %17
    %vm19 = vcmask 195712
    %20 = vst.msk [vmem:[#allocation0] sm:$0x1] %vm19, %v18
    %s21 = scalar_lea.vmem [#allocation1], 1
    %v22 = vld [vmem:[%s21] sm:$0x1]
    %23 = vrot.lane.b32.xlu0 %v22, 8
    %v24 = vpop.permute.xlu0 %23
    %vm25 = vcmask 130112
    %26 = vst.msk [vmem:[#allocation0] sm:$0x1] %vm25, %v24
    %s28 = ssub.s32 2, 1
    %v29 = vld [vmem:[#allocation0] sm:%s28]
    %s31 = ssub.s32 2, 1
    %32 = vst [vmem:[%s1] sm:%s31] %v29

// kernel: dit_block.4
$region0: #{dit_block.4}
  #allocation0 [shape = 'u32[]', space=smem, size = 0x4, offset = 0x4, fixed_abs, tag = 'smem constant byte address 0x4 - core index']
  #allocation1 [shape = 'u32[72,128]{1,0:T(1,128)}', space=vmem, size = 0x9000, scoped, tag = 'internal scratch']
  #allocation2 [shape = 'f32[8,1]{1,0:T(8,128)}', space=vmem, size = 0x1000, scoped, tag = 'scratch operand']
  #allocation3 [shape = 'f32[8,1]{1,0:T(8,128)}', space=vmem, size = 0x1000, scoped, tag = 'scratch operand']
  #allocation4 [shape = 'f32[8,8]{1,0:T(8,128)}', space=vmem, size = 0x1000, scoped, tag = 'scratch operand']
  %s0 = inlined_call_operand.vmem [shape: f32[8,8,8], index: 0, kind: input, shape index: {}]
  %s1 = inlined_call_operand.vmem [shape: f32[8,8,8], index: 1, kind: input, shape index: {}]
  %s2 = inlined_call_operand.vmem [shape: f32[8,8,8], index: 2, kind: input, shape index: {}]
  %s3 = inlined_call_operand.vmem [shape: f32[8,8,8], index: 3, kind: output, shape index: {}]
  %s4 = sld [smem:[#allocation0]]
  $region53: #{dit_block.4} parent=0
    _
  %s6 = ssub.s32 1, %s4
  %s7 = scalar_select 0, %s6, %s4
  loop: start=0, step=1, limit=10
  $region2: #{dit_block.4} parent=0 // loop_pre_header
    _
  $region3: #{dit_block.4} parent=0 // loop_header
    %s9 = sphi 0, %s13
    %p10 = scmp.ge.s32.totalorder %s9, 10
    %s16 = sphi 0, %s35
    %s17 = sphi 0, %s31
    %s18 = sphi 0, %s27
    %s19 = sphi 0, %s16
    %s20 = sphi 0, %s17
    %s21 = sphi 0, %s18
    %s22 = sphi 0, %s19
    %s23 = sphi 0, %s20
    %s24 = sphi 0, %s21
    %s40 = sphi 0, %s42
    %s43 = sphi 0, %s40
    %s44 = sphi 0, %s43
    %s60 = sphi 0, %s44
    %s68 = sphi 0, %s70
    %s71 = sphi 0, %s68
    %s72 = sphi 0, %s71
    %s88 = sphi 0, %s72
    %s96 = sphi 0, %s98
    %s99 = sphi 0, %s96
    %s100 = sphi 0, %s99
    %s116 = sphi 0, %s100
    %s124 = sphi 0, %s126
    %s127 = sphi 0, %s124
    %s128 = sphi 0, %s127
    %s144 = sphi 0, %s128
  $region4: #{dit_block.4} parent=0 // loop_header_branch
    %12 = sbr.rel (%p10) target = $region8
  $region5: #{dit_block.4} parent=0 // loop_body
    %s14 = ssub.s32 %s9, 1
    %s15 = ssub.s32 %s9, 2
    %s25 = sadd.s32 1, %s18
    %p26 = scmp.ge.s32.totalorder %s25, 1
    %s27 = scalar_select %p26, 0, %s25
    %s28 = sadd.s32 1, %s17
    %s29 = scalar_select %p26, %s28, %s17
    %p30 = scmp.ge.s32.totalorder %s29, 1
    %s31 = scalar_select %p30, 0, %s29
    %s32 = sadd.s32 1, %s16
    %s33 = scalar_select %p30, %s32, %s16
    %p34 = scmp.ge.s32.totalorder %s33, 8
    %s35 = scalar_select %p34, 0, %s33
    %s36 = ssub.s32 %s16, %s35
    %s37 = ssub.s32 %s17, %s31
    %s38 = sor.u32 %s36, %s37
    %p39 = scmp.eq.s32.totalorder %s38, 0
    %s41 = sadd.s32 %s40, 1
    %s42 = scalar_select %p39, %s40, %s41
    %p45 = pneg %p39
    %p46 = scmp.eq.s32.totalorder %s9, 7
    %p47 = por %p45, %p46
    %p48 = scmp.ne.s32.totalorder %s40, %s43
    %p49 = scmp.eq.s32.totalorder %s9, 0
    %p50 = por %p48, %p49
    %p51 = scmp.ne.s32.totalorder %s40, %s43
    %p52 = scmp.eq.s32.totalorder %s14, 7
    %p53 = por %p51, %p52
    %p54 = scmp.ne.s32.totalorder %s43, %s44
    %p55 = scmp.eq.s32.totalorder %s14, 0
    %p56 = por %p54, %p55
    %p57 = scmp.ne.s32.totalorder %s43, %s44
    %p58 = scmp.eq.s32.totalorder %s15, 7
    %p59 = por %p57, %p58
    %p61 = scmp.ne.s32.totalorder %s44, %s60
    %p62 = scmp.eq.s32.totalorder %s15, 0
    %p63 = por %p61, %p62
    %s64 = ssub.s32 %s16, %s35
    %s65 = ssub.s32 %s18, %s27
    %s66 = sor.u32 %s64, %s65
    %p67 = scmp.eq.s32.totalorder %s66, 0
    %s69 = sadd.s32 %s68, 1
    %s70 = scalar_select %p67, %s68, %s69
    %p73 = pneg %p67
    %p74 = scmp.eq.s32.totalorder %s9, 7
    %p75 = por %p73, %p74
    %p76 = scmp.ne.s32.totalorder %s68, %s71
    %p77 = scmp.eq.s32.totalorder %s9, 0
    %p78 = por %p76, %p77
    %p79 = scmp.ne.s32.totalorder %s68, %s71
    %p80 = scmp.eq.s32.totalorder %s14, 7
    %p81 = por %p79, %p80
    %p82 = scmp.ne.s32.totalorder %s71, %s72
    %p83 = scmp.eq.s32.totalorder %s14, 0
    %p84 = por %p82, %p83
    %p85 = scmp.ne.s32.totalorder %s71, %s72
    %p86 = scmp.eq.s32.totalorder %s15, 7
    %p87 = por %p85, %p86
    %p89 = scmp.ne.s32.totalorder %s72, %s88
    %p90 = scmp.eq.s32.totalorder %s15, 0
    %p91 = por %p89, %p90
    %s92 = ssub.s32 %s16, %s35
    %s93 = ssub.s32 %s18, %s27
    %s94 = sor.u32 %s92, %s93
    %p95 = scmp.eq.s32.totalorder %s94, 0
    %s97 = sadd.s32 %s96, 1
    %s98 = scalar_select %p95, %s96, %s97
    %p101 = pneg %p95
    %p102 = scmp.eq.s32.totalorder %s9, 7
    %p103 = por %p101, %p102
    %p104 = scmp.ne.s32.totalorder %s96, %s99
    %p105 = scmp.eq.s32.totalorder %s9, 0
    %p106 = por %p104, %p105
    %p107 = scmp.ne.s32.totalorder %s96, %s99
    %p108 = scmp.eq.s32.totalorder %s14, 7
    %p109 = por %p107, %p108
    %p110 = scmp.ne.s32.totalorder %s99, %s100
    %p111 = scmp.eq.s32.totalorder %s14, 0
    %p112 = por %p110, %p111
    %p113 = scmp.ne.s32.totalorder %s99, %s100
    %p114 = scmp.eq.s32.totalorder %s15, 7
    %p115 = por %p113, %p114
    %p117 = scmp.ne.s32.totalorder %s100, %s116
    %p118 = scmp.eq.s32.totalorder %s15, 0
    %p119 = por %p117, %p118
    %s120 = ssub.s32 %s16, %s35
    %s121 = ssub.s32 %s17, %s31
    %s122 = sor.u32 %s120, %s121
    %p123 = scmp.eq.s32.totalorder %s122, 0
    %s125 = sadd.s32 %s124, 1
    %s126 = scalar_select %p123, %s124, %s125
    %p129 = pneg %p123
    %p130 = scmp.eq.s32.totalorder %s9, 7
    %p131 = por %p129, %p130
    %p132 = scmp.ne.s32.totalorder %s124, %s127
    %p133 = scmp.eq.s32.totalorder %s9, 0
    %p134 = por %p132, %p133
    %p135 = scmp.ne.s32.totalorder %s124, %s127
    %p136 = scmp.eq.s32.totalorder %s14, 7
    %p137 = por %p135, %p136
    %p138 = scmp.ne.s32.totalorder %s127, %s128
    %p139 = scmp.eq.s32.totalorder %s14, 0
    %p140 = por %p138, %p139
    %p141 = scmp.ne.s32.totalorder %s127, %s128
    %p142 = scmp.eq.s32.totalorder %s15, 7
    %p143 = por %p141, %p142
    %p145 = scmp.ne.s32.totalorder %s128, %s144
    %p146 = scmp.eq.s32.totalorder %s15, 0
    %p147 = por %p145, %p146
    %p148 = scmp.le.s32.totalorder 1, %s9
    %p149 = scmp.lt.s32.totalorder %s9, 9
    %p150 = pnand %p148, %p149
    %p151 = pneg %p150
    // Predicated region
    $region9: #{dit_block.4} parent=5 // pred_check
      _
    $region10: #{dit_block.4} parent=5 // pred_check_branch
      %153 = sbr.rel (%p150) target = $region12
    $region11: #{dit_block.4} parent=5 // pred_region
      %s154 = ssub.s32 %s9, 1
    $region12: #{dit_block.4} parent=5 // pred_fallthru
      _
    %p155 = scmp.lt.s32.totalorder %s9, 8
    // Predicated region
    $region13: #{dit_block.4} parent=5 // pred_check
      %p156 = pneg %p155
    $region14: #{dit_block.4} parent=5 // pred_check_branch
      %158 = sbr.rel (%p156) target = $region16
    $region15: #{dit_block.4} parent=5 // pred_region
      // Predicated region
      $region17: #{dit_block.4} parent=15 // pred_check
        %p159 = pneg %p50
      $region18: #{dit_block.4} parent=15 // pred_check_branch
        %161 = sbr.rel (%p159) target = $region20
      $region19: #{dit_block.4} parent=15 // pred_region
        %p162 = scmp.lt.s32.totalorder %s16, 7
        %s163 = scalar_select %p162, %s16, 7
        %p164 = scmp.lt.s32.totalorder %s17, 0
        %s165 = scalar_select %p164, %s17, 0
        %s166 = sadd.s32 %s165, %s163
        %s167 = smul.addr %s166, 8
        %s168 = scalar_lea.vmem %s0, %s167
      $region20: #{dit_block.4} parent=15 // pred_fallthru
        _
      // Predicated region
      $region21: #{dit_block.4} parent=15 // pred_check
        %p169 = pneg %p78
      $region22: #{dit_block.4} parent=15 // pred_check_branch
        %171 = sbr.rel (%p169) target = $region24
      $region23: #{dit_block.4} parent=15 // pred_region
        %p172 = scmp.lt.s32.totalorder %s16, 7
        %s173 = scalar_select %p172, %s16, 7
        %p174 = scmp.lt.s32.totalorder %s18, 0
        %s175 = scalar_select %p174, %s18, 0
        %s176 = sadd.s32 %s175, %s173
        %s177 = smul.addr %s176, 8
        %s178 = scalar_lea.vmem %s1, %s177
      $region24: #{dit_block.4} parent=15 // pred_fallthru
        _
      // Predicated region
      $region25: #{dit_block.4} parent=15 // pred_check
        %p179 = pneg %p106
      $region26: #{dit_block.4} parent=15 // pred_check_branch
        %181 = sbr.rel (%p179) target = $region28
      $region27: #{dit_block.4} parent=15 // pred_region
        %p182 = scmp.lt.s32.totalorder %s16, 7
        %s183 = scalar_select %p182, %s16, 7
        %p184 = scmp.lt.s32.totalorder %s18, 0
        %s185 = scalar_select %p184, %s18, 0
        %s186 = sadd.s32 %s185, %s183
        %s187 = smul.addr %s186, 8
        %s188 = scalar_lea.vmem %s2, %s187
      $region28: #{dit_block.4} parent=15 // pred_fallthru
        _
    $region16: #{dit_block.4} parent=5 // pred_fallthru
      _
    %p189 = scmp.le.s32.totalorder 1, %s9
    %p190 = scmp.lt.s32.totalorder %s9, 9
    %p191 = pnand %p189, %p190
    %p192 = pneg %p191
    // Predicated region
    $region29: #{dit_block.4} parent=5 // pred_check
      _
    $region30: #{dit_block.4} parent=5 // pred_check_branch
      %194 = sbr.rel (%p191) target = $region32
    $region31: #{dit_block.4} parent=5 // pred_region
      %s195 = ssub.s32 %s9, 1
      %p196 = scmp.lt.s32.totalorder %s19, 7
      %s197 = scalar_select %p196, %s19, 7
      %p198 = scmp.lt.s32.totalorder %s20, 0
      %s199 = scalar_select %p198, %s20, 0
      %s200 = sadd.s32 %s199, %s197
      %s201 = smul.addr %s200, 8
      %s202 = scalar_lea.vmem %s0, %s201
      %p203 = pneg %p56
      %p204 = pneg %p53
      %p205 = scmp.lt.s32.totalorder %s19, 7
      %s206 = scalar_select %p205, %s19, 7
      %p207 = scmp.lt.s32.totalorder %s21, 0
      %s208 = scalar_select %p207, %s21, 0
      %s209 = sadd.s32 %s208, %s206
      %s210 = smul.addr %s209, 8
      %s211 = scalar_lea.vmem %s1, %s210
      %p212 = pneg %p84
      %p213 = pneg %p81
      %p214 = scmp.lt.s32.totalorder %s19, 7
      %s215 = scalar_select %p214, %s19, 7
      %p216 = scmp.lt.s32.totalorder %s21, 0
      %s217 = scalar_select %p216, %s21, 0
      %s218 = sadd.s32 %s217, %s215
      %s219 = smul.addr %s218, 8
      %s220 = scalar_lea.vmem %s2, %s219
      %p221 = pneg %p112
      %p222 = pneg %p109
      %p223 = pneg %p140
      %p224 = pneg %p137
      %p225 = scmp.lt.s32.totalorder %s19, 7
      %s226 = scalar_select %p225, %s19, 7
      %p227 = scmp.lt.s32.totalorder %s20, 0
      %s228 = scalar_select %p227, %s20, 0
      %s229 = sadd.s32 %s228, %s226
      %s230 = smul.addr %s229, 8
      %s231 = scalar_lea.vmem %s3, %s230
      %p232 = scmp.lt.s32.totalorder %s19, 7
      %s233 = scalar_select %p232, %s19, 7
      %p234 = scmp.lt.s32.totalorder %s20, 0
      %s235 = scalar_select %p234, %s20, 0
      %s236 = sadd.s32 %s235, %s233
      %s237 = smul.addr %s236, 8
      %s238 = scalar_lea.vmem %s0, %s237
      %p239 = scmp.lt.s32.totalorder %s19, 7
      %s240 = scalar_select %p239, %s19, 7
      %p241 = scmp.lt.s32.totalorder %s21, 0
      %s242 = scalar_select %p241, %s21, 0
      %s243 = sadd.s32 %s242, %s240
      %s244 = smul.addr %s243, 8
      %s245 = scalar_lea.vmem %s1, %s244
      %p246 = scmp.lt.s32.totalorder %s19, 7
      %s247 = scalar_select %p246, %s19, 7
      %p248 = scmp.lt.s32.totalorder %s21, 0
      %s249 = scalar_select %p248, %s21, 0
      %s250 = sadd.s32 %s249, %s247
      %s251 = smul.addr %s250, 8
      %s252 = scalar_lea.vmem %s2, %s251
      %p253 = scmp.lt.s32.totalorder %s19, 7
      %s254 = scalar_select %p253, %s19, 7
      %p255 = scmp.lt.s32.totalorder %s20, 0
      %s256 = scalar_select %p255, %s20, 0
      %s257 = sadd.s32 %s256, %s254
      %s258 = smul.addr %s257, 8
      %s259 = scalar_lea.vmem %s3, %s258
      %p260 = scmp.eq.s32.totalorder %s21, 0
      // Predicated region
      $region33: #{dit_block.4} parent=31 // pred_check
        %p261 = pneg %p260
      $region34: #{dit_block.4} parent=31 // pred_check_branch
        %263 = sbr.rel (%p261) target = $region36
      $region35: #{dit_block.4} parent=31 // pred_region
        %vm264 = vcmask 7168
        %265 = vst.msk [vmem:[#allocation2] sm:$0xff] %vm264, -inf
        %266 = vst.msk [vmem:[#allocation3] sm:$0xff] %vm264, 0.0
        %vm267 = vcmask 64512
        %268 = vst.msk [vmem:[#allocation4] sm:$0xff] %vm267, 0.0
      $region36: #{dit_block.4} parent=31 // pred_fallthru
        _
      %v269 = vld [vmem:[%s238] sm:$0xff]
      %v270 = vmul.f32 %v269, 0.35355338
      %v271 = vld [vmem:[%s245] sm:$0xff]
      %v272 = vld [vmem:[%s252] sm:$0xff]
      %vm273 = vcmask 64512
      %v275 = vsel %vm273, %v270, 0
      %v278 = vsel %vm273, %v271, 0
      %280 = vmatpush.xpose.msra.mxu0 0.0
      %281 = vmatpush.xpose.msra.mxu0 0.0
      %282 = vmatpush.xpose.msra.mxu0 0.0
      %283 = vmatpush.xpose.msra.mxu0 0.0
      %284 = vmatpush.xpose.msra.mxu0 0.0
      %285 = vmatpush.xpose.msra.mxu0 0.0
      %286 = vmatpush.xpose.msra.mxu0 0.0
      %287 = vmatpush.xpose.msra.mxu0 0.0
      %288 = vmatpush.xpose.msra.mxu0 0.0
      %289 = vmatpush.xpose.msra.mxu0 0.0
      %290 = vmatpush.xpose.msra.mxu0 0.0
      %291 = vmatpush.xpose.msra.mxu0 0.0
      %292 = vmatpush.xpose.msra.mxu0 0.0
      %293 = vmatpush.xpose.msra.mxu0 0.0
      %294 = vmatpush.xpose.msra.mxu0 0.0
      %295 = vmatpush.xpose.msra.mxu0 %v278
      %296 = vmatmul.f32.gmra.mxu0 %v275
      %v297 = vpop.f32.mrf.mxu0
      %v298 = vadd.f32 0.0, %v297
      %299 = vdwg.mxu0
      %v300 = vld [vmem:[#allocation2] sm:$0xff]
      %v301 = vsel %vm273, %v298, -inf
      %302 = vmax.xlane.f32.xlu0 %v301
      %v303 = vpop.xlane.xlu0 %302
      %v304 = vmax.f32 %v300, %v303
      %v305 = vsub.f32 %v300, %v304
      %v306 = vmul.f32 %v305, 1.442695
      %v307 = vpow.pop %v306
      %309 = vset.pattern.permute.xlu0 0
      %310 = vperm.xlu0 %309, %v304
      %v311 = vpop.permute.xlu0 %310
      %v313 = vsub.f32 %v298, %v311
      %v314 = vmul.f32 %v313, 1.442695
      %v315 = vpow.pop %v314
      %v316 = vld [vmem:[#allocation3] sm:$0xff]
      %v317 = vmul.f32 %v307, %v316
      %v318 = vsel %vm273, %v315, 0.0
      %319 = vadd.xlane.f32.xlu0 %v318
      %v320 = vpop.xlane.xlu0 %319
      %v321 = vadd.f32 %v317, %v320
      %vm322 = vcmask 7168
      %323 = vst.msk [vmem:[#allocation3] sm:$0xff] %vm322, %v321
      %v324 = vld [vmem:[#allocation4] sm:$0xff]
      %326 = vset.pattern.permute.xlu0 0
      %327 = vperm.xlu0 %326, %v307
      %v328 = vpop.permute.xlu0 %327
      %v330 = vmul.f32 %v328, %v324
      %v332 = vsel %vm273, %v315, 0
      %334 = vmatpush.msra.mxu0 0.0
      %335 = vmatpush.msra.mxu0 0.0
      %336 = vmatpush.msra.mxu0 0.0
      %337 = vmatpush.msra.mxu0 0.0
      %338 = vmatpush.msra.mxu0 0.0
      %339 = vmatpush.msra.mxu0 0.0
      %340 = vmatpush.msra.mxu0 0.0
      %341 = vmatpush.msra.mxu0 0.0
      %342 = vmatpush.msra.mxu0 0.0
      %343 = vmatpush.msra.mxu0 0.0
      %344 = vmatpush.msra.mxu0 0.0
      %345 = vmatpush.msra.mxu0 0.0
      %346 = vmatpush.msra.mxu0 0.0
      %347 = vmatpush.msra.mxu0 0.0
      %348 = vmatpush.msra.mxu0 0.0
      %349 = vmatpush.msra.mxu0 %v272
      %350 = vmatmul.f32.gmra.mxu0 %v332
      %v351 = vpop.f32.mrf.mxu0
      %v352 = vadd.f32 0.0, %v351
      %353 = vdwg.mxu0
      %v354 = vadd.f32 %v330, %v352
      %355 = vst.msk [vmem:[#allocation4] sm:$0xff] %vm273, %v354
      %356 = vst.msk [vmem:[#allocation2] sm:$0xff] %vm322, %v304
      // Predicated region
      $region37: #{dit_block.4} parent=31 // pred_check
        %p357 = pneg %p260
      $region38: #{dit_block.4} parent=31 // pred_check_branch
        %359 = sbr.rel (%p357) target = $region40
      $region39: #{dit_block.4} parent=31 // pred_region
        %v360 = vld [vmem:[#allocation4] sm:$0xff]
        %v361 = vld [vmem:[#allocation3] sm:$0xff]
        %363 = vset.pattern.permute.xlu0 0
        %364 = vperm.xlu0 %363, %v361
        %v365 = vpop.permute.xlu0 %364
        %v367 = vrcp.pop %v365
        %v368 = vmul.f32 %v365, %v367
        %v369 = vsub.f32 1.0, %v368
        %v370 = vmul.f32 %v367, %v369
        %v371 = vadd.f32 %v367, %v370
        %vm372 = vweird.f32 %v365
        %vm373 = vweird.f32 %v367
        %vm374 = vmor %vm372, %vm373
        %v375 = vsel %vm374, %v367, %v371
        %v376 = vand.u32 2147483647, %v365
        %vm377 = vcmp.eq.f32.partialorder %v376, 8.507059e+37
        %v378 = vand.u32 %v365, 2147483648
        %v379 = vor.u32 1.1754944e-38, %v378
        %v380 = vsel %vm377, %v379, %v375
        %v381 = vmul.f32 %v360, %v380
        %382 = vst.msk [vmem:[%s259] sm:$0xff] %vm273, %v381
      $region40: #{dit_block.4} parent=31 // pred_fallthru
        _
      %p383 = scmp.lt.s32.totalorder %s19, 7
      %s384 = scalar_select %p383, %s19, 7
      %p385 = scmp.lt.s32.totalorder %s20, 0
      %s386 = scalar_select %p385, %s20, 0
      %s387 = sadd.s32 %s386, %s384
      %s388 = smul.addr %s387, 8
      %s389 = scalar_lea.vmem %s3, %s388
      // Predicated region
      $region41: #{dit_block.4} parent=31 // pred_check
        %p390 = pneg %p137
      $region42: #{dit_block.4} parent=31 // pred_check_branch
        %392 = sbr.rel (%p390) target = $region44
      $region43: #{dit_block.4} parent=31 // pred_region
        _
      $region44: #{dit_block.4} parent=31 // pred_fallthru
        _
    $region32: #{dit_block.4} parent=5 // pred_fallthru
      _
    %p393 = scmp.le.s32.totalorder 2, %s9
    // Predicated region
    $region45: #{dit_block.4} parent=5 // pred_check
      %p394 = pneg %p393
    $region46: #{dit_block.4} parent=5 // pred_check_branch
      %396 = sbr.rel (%p394) target = $region48
    $region47: #{dit_block.4} parent=5 // pred_region
      %s397 = ssub.s32 %s9, 2
      // Predicated region
      $region49: #{dit_block.4} parent=47 // pred_check
        %p398 = pneg %p143
      $region50: #{dit_block.4} parent=47 // pred_check_branch
        %400 = sbr.rel (%p398) target = $region52
      $region51: #{dit_block.4} parent=47 // pred_region
        %p401 = scmp.lt.s32.totalorder %s22, 7
        %s402 = scalar_select %p401, %s22, 7
        %p403 = scmp.lt.s32.totalorder %s23, 0
        %s404 = scalar_select %p403, %s23, 0
        %s405 = sadd.s32 %s404, %s402
        %s406 = smul.addr %s405, 8
        %s407 = scalar_lea.vmem %s3, %s406
      $region52: #{dit_block.4} parent=47 // pred_fallthru
        _
    $region48: #{dit_block.4} parent=5 // pred_fallthru
      _
  $region6: #{dit_block.4} parent=0 // loop_footer
    %s13 = sadd.s32 1, %s9
  $region7: #{dit_block.4} parent=0 // loop_footer_branch
    %8 = sbr.rel target = $region3
  $region8: #{dit_block.4} parent=0 // loop_exit
    _

// kernel: dit_block.3
$region0: #{dit_block.3}
  #allocation0 [shape = 'u32[]', space=smem, size = 0x4, offset = 0x4, fixed_abs, tag = 'smem constant byte address 0x4 - core index']
  #allocation1 [shape = 'u32[72,128]{1,0:T(1,128)}', space=vmem, size = 0x9000, scoped, tag = 'internal scratch']
  %s0 = inlined_call_operand.vmem [shape: f32[2,8,32], index: 0, kind: input, shape index: {}]
  %s1 = inlined_call_operand.vmem [shape: f32[2,1,32], index: 1, kind: input, shape index: {}]
  %s2 = inlined_call_operand.vmem [shape: f32[2,1,32], index: 2, kind: input, shape index: {}]
  %s3 = inlined_call_operand.vmem [shape: f32[32,32], index: 3, kind: input, shape index: {}]
  %s4 = inlined_call_operand.vmem [shape: f32[1,32], index: 4, kind: input, shape index: {}]
  %s5 = inlined_call_operand.vmem [shape: f32[32,32], index: 5, kind: input, shape index: {}]
  %s6 = inlined_call_operand.vmem [shape: f32[1,32], index: 6, kind: input, shape index: {}]
  %s7 = inlined_call_operand.vmem [shape: f32[32,32], index: 7, kind: input, shape index: {}]
  %s8 = inlined_call_operand.vmem [shape: f32[1,32], index: 8, kind: input, shape index: {}]
  %s9 = inlined_call_operand.vmem [shape: f32[1,32], index: 9, kind: input, shape index: {}]
  %s10 = inlined_call_operand.vmem [shape: f32[1,32], index: 10, kind: input, shape index: {}]
  %s11 = inlined_call_operand.vmem [shape: f32[2,8,32], index: 11, kind: output, shape index: {0}]
  %s12 = inlined_call_operand.vmem [shape: f32[2,8,32], index: 12, kind: output, shape index: {1}]
  %s13 = inlined_call_operand.vmem [shape: f32[2,8,32], index: 13, kind: output, shape index: {2}]
  %14 = xla_tuple %s11, %s12, %s13
  %s15 = sld [smem:[#allocation0]]
  $region93: #{dit_block.3} parent=0
    _
  %s17 = ssub.s32 1, %s15
  %s18 = scalar_select 0, %s17, %s15
  loop: start=0, step=1, limit=4
  $region2: #{dit_block.3} parent=0 // loop_pre_header
    _
  $region3: #{dit_block.3} parent=0 // loop_header
    %s20 = sphi 0, %s24
    %p21 = scmp.ge.s32.totalorder %s20, 4
    %s27 = sphi 0, %s39
    %s28 = sphi 0, %s35
    %s29 = sphi 0, %s27
    %s30 = sphi 0, %s28
    %s31 = sphi 0, %s29
    %s32 = sphi 0, %s30
    %s44 = sphi 0, %s46
    %s47 = sphi 0, %s44
    %s48 = sphi 0, %s47
    %s64 = sphi 0, %s48
    %s70 = sphi 0, %s72
    %s73 = sphi 0, %s70
    %s74 = sphi 0, %s73
    %s90 = sphi 0, %s74
    %s96 = sphi 0, %s98
    %s99 = sphi 0, %s96
    %s100 = sphi 0, %s99
    %s116 = sphi 0, %s100
    %s120 = sphi 0, %s120
    %s122 = sphi 0, %s120
    %s123 = sphi 0, %s122
    %s137 = sphi 0, %s123
    %s141 = sphi 0, %s141
    %s143 = sphi 0, %s141
    %s144 = sphi 0, %s143
    %s158 = sphi 0, %s144
    %s162 = sphi 0, %s162
    %s164 = sphi 0, %s162
    %s165 = sphi 0, %s164
    %s179 = sphi 0, %s165
    %s183 = sphi 0, %s183
    %s185 = sphi 0, %s183
    %s186 = sphi 0, %s185
    %s200 = sphi 0, %s186
    %s204 = sphi 0, %s204
    %s206 = sphi 0, %s204
    %s207 = sphi 0, %s206
    %s221 = sphi 0, %s207
    %s225 = sphi 0, %s225
    %s227 = sphi 0, %s225
    %s228 = sphi 0, %s227
    %s242 = sphi 0, %s228
    %s246 = sphi 0, %s246
    %s248 = sphi 0, %s246
    %s249 = sphi 0, %s248
    %s263 = sphi 0, %s249
    %s267 = sphi 0, %s267
    %s269 = sphi 0, %s267
    %s270 = sphi 0, %s269
    %s284 = sphi 0, %s270
    %s292 = sphi 0, %s294
    %s295 = sphi 0, %s292
    %s296 = sphi 0, %s295
    %s312 = sphi 0, %s296
    %s320 = sphi 0, %s322
    %s323 = sphi 0, %s320
    %s324 = sphi 0, %s323
    %s340 = sphi 0, %s324
    %s348 = sphi 0, %s350
    %s351 = sphi 0, %s348
    %s352 = sphi 0, %s351
    %s368 = sphi 0, %s352
  $region4: #{dit_block.3} parent=0 // loop_header_branch
    %23 = sbr.rel (%p21) target = $region8
  $region5: #{dit_block.3} parent=0 // loop_body
    %s25 = ssub.s32 %s20, 1
    %s26 = ssub.s32 %s20, 2
    %s33 = sadd.s32 1, %s28
    %p34 = scmp.ge.s32.totalorder %s33, 1
    %s35 = scalar_select %p34, 0, %s33
    %s36 = sadd.s32 1, %s27
    %s37 = scalar_select %p34, %s36, %s27
    %p38 = scmp.ge.s32.totalorder %s37, 2
    %s39 = scalar_select %p38, 0, %s37
    %s40 = ssub.s32 %s27, %s39
    %s41 = ssub.s32 %s28, %s35
    %s42 = sor.u32 %s40, %s41
    %p43 = scmp.eq.s32.totalorder %s42, 0
    %s45 = sadd.s32 %s44, 1
    %s46 = scalar_select %p43, %s44, %s45
    %p49 = pneg %p43
    %p50 = scmp.eq.s32.totalorder %s20, 1
    %p51 = por %p49, %p50
    %p52 = scmp.ne.s32.totalorder %s44, %s47
    %p53 = scmp.eq.s32.totalorder %s20, 0
    %p54 = por %p52, %p53
    %p55 = scmp.ne.s32.totalorder %s44, %s47
    %p56 = scmp.eq.s32.totalorder %s25, 1
    %p57 = por %p55, %p56
    %p58 = scmp.ne.s32.totalorder %s47, %s48
    %p59 = scmp.eq.s32.totalorder %s25, 0
    %p60 = por %p58, %p59
    %p61 = scmp.ne.s32.totalorder %s47, %s48
    %p62 = scmp.eq.s32.totalorder %s26, 1
    %p63 = por %p61, %p62
    %p65 = scmp.ne.s32.totalorder %s48, %s64
    %p66 = scmp.eq.s32.totalorder %s26, 0
    %p67 = por %p65, %p66
    %s68 = ssub.s32 %s27, %s39
    %p69 = scmp.eq.s32.totalorder %s68, 0
    %s71 = sadd.s32 %s70, 1
    %s72 = scalar_select %p69, %s70, %s71
    %p75 = pneg %p69
    %p76 = scmp.eq.s32.totalorder %s20, 1
    %p77 = por %p75, %p76
    %p78 = scmp.ne.s32.totalorder %s70, %s73
    %p79 = scmp.eq.s32.totalorder %s20, 0
    %p80 = por %p78, %p79
    %p81 = scmp.ne.s32.totalorder %s70, %s73
    %p82 = scmp.eq.s32.totalorder %s25, 1
    %p83 = por %p81, %p82
    %p84 = scmp.ne.s32.totalorder %s73, %s74
    %p85 = scmp.eq.s32.totalorder %s25, 0
    %p86 = por %p84, %p85
    %p87 = scmp.ne.s32.totalorder %s73, %s74
    %p88 = scmp.eq.s32.totalorder %s26, 1
    %p89 = por %p87, %p88
    %p91 = scmp.ne.s32.totalorder %s74, %s90
    %p92 = scmp.eq.s32.totalorder %s26, 0
    %p93 = por %p91, %p92
    %s94 = ssub.s32 %s27, %s39
    %p95 = scmp.eq.s32.totalorder %s94, 0
    %s97 = sadd.s32 %s96, 1
    %s98 = scalar_select %p95, %s96, %s97
    %p101 = pneg %p95
    %p102 = scmp.eq.s32.totalorder %s20, 1
    %p103 = por %p101, %p102
    %p104 = scmp.ne.s32.totalorder %s96, %s99
    %p105 = scmp.eq.s32.totalorder %s20, 0
    %p106 = por %p104, %p105
    %p107 = scmp.ne.s32.totalorder %s96, %s99
    %p108 = scmp.eq.s32.totalorder %s25, 1
    %p109 = por %p107, %p108
    %p110 = scmp.ne.s32.totalorder %s99, %s100
    %p111 = scmp.eq.s32.totalorder %s25, 0
    %p112 = por %p110, %p111
    %p113 = scmp.ne.s32.totalorder %s99, %s100
    %p114 = scmp.eq.s32.totalorder %s26, 1
    %p115 = por %p113, %p114
    %p117 = scmp.ne.s32.totalorder %s100, %s116
    %p118 = scmp.eq.s32.totalorder %s26, 0
    %p119 = por %p117, %p118
    %s121 = sadd.s32 %s120, 1
    %p124 = scmp.eq.s32.totalorder %s20, 1
    %p125 = scmp.ne.s32.totalorder %s120, %s122
    %p126 = scmp.eq.s32.totalorder %s20, 0
    %p127 = por %p125, %p126
    %p128 = scmp.ne.s32.totalorder %s120, %s122
    %p129 = scmp.eq.s32.totalorder %s25, 1
    %p130 = por %p128, %p129
    %p131 = scmp.ne.s32.totalorder %s122, %s123
    %p132 = scmp.eq.s32.totalorder %s25, 0
    %p133 = por %p131, %p132
    %p134 = scmp.ne.s32.totalorder %s122, %s123
    %p135 = scmp.eq.s32.totalorder %s26, 1
    %p136 = por %p134, %p135
    %p138 = scmp.ne.s32.totalorder %s123, %s137
    %p139 = scmp.eq.s32.totalorder %s26, 0
    %p140 = por %p138, %p139
    %s142 = sadd.s32 %s141, 1
    %p145 = scmp.eq.s32.totalorder %s20, 1
    %p146 = scmp.ne.s32.totalorder %s141, %s143
    %p147 = scmp.eq.s32.totalorder %s20, 0
    %p148 = por %p146, %p147
    %p149 = scmp.ne.s32.totalorder %s141, %s143
    %p150 = scmp.eq.s32.totalorder %s25, 1
    %p151 = por %p149, %p150
    %p152 = scmp.ne.s32.totalorder %s143, %s144
    %p153 = scmp.eq.s32.totalorder %s25, 0
    %p154 = por %p152, %p153
    %p155 = scmp.ne.s32.totalorder %s143, %s144
    %p156 = scmp.eq.s32.totalorder %s26, 1
    %p157 = por %p155, %p156
    %p159 = scmp.ne.s32.totalorder %s144, %s158
    %p160 = scmp.eq.s32.totalorder %s26, 0
    %p161 = por %p159, %p160
    %s163 = sadd.s32 %s162, 1
    %p166 = scmp.eq.s32.totalorder %s20, 1
    %p167 = scmp.ne.s32.totalorder %s162, %s164
    %p168 = scmp.eq.s32.totalorder %s20, 0
    %p169 = por %p167, %p168
    %p170 = scmp.ne.s32.totalorder %s162, %s164
    %p171 = scmp.eq.s32.totalorder %s25, 1
    %p172 = por %p170, %p171
    %p173 = scmp.ne.s32.totalorder %s164, %s165
    %p174 = scmp.eq.s32.totalorder %s25, 0
    %p175 = por %p173, %p174
    %p176 = scmp.ne.s32.totalorder %s164, %s165
    %p177 = scmp.eq.s32.totalorder %s26, 1
    %p178 = por %p176, %p177
    %p180 = scmp.ne.s32.totalorder %s165, %s179
    %p181 = scmp.eq.s32.totalorder %s26, 0
    %p182 = por %p180, %p181
    %s184 = sadd.s32 %s183, 1
    %p187 = scmp.eq.s32.totalorder %s20, 1
    %p188 = scmp.ne.s32.totalorder %s183, %s185
    %p189 = scmp.eq.s32.totalorder %s20, 0
    %p190 = por %p188, %p189
    %p191 = scmp.ne.s32.totalorder %s183, %s185
    %p192 = scmp.eq.s32.totalorder %s25, 1
    %p193 = por %p191, %p192
    %p194 = scmp.ne.s32.totalorder %s185, %s186
    %p195 = scmp.eq.s32.totalorder %s25, 0
    %p196 = por %p194, %p195
    %p197 = scmp.ne.s32.totalorder %s185, %s186
    %p198 = scmp.eq.s32.totalorder %s26, 1
    %p199 = por %p197, %p198
    %p201 = scmp.ne.s32.totalorder %s186, %s200
    %p202 = scmp.eq.s32.totalorder %s26, 0
    %p203 = por %p201, %p202
    %s205 = sadd.s32 %s204, 1
    %p208 = scmp.eq.s32.totalorder %s20, 1
    %p209 = scmp.ne.s32.totalorder %s204, %s206
    %p210 = scmp.eq.s32.totalorder %s20, 0
    %p211 = por %p209, %p210
    %p212 = scmp.ne.s32.totalorder %s204, %s206
    %p213 = scmp.eq.s32.totalorder %s25, 1
    %p214 = por %p212, %p213
    %p215 = scmp.ne.s32.totalorder %s206, %s207
    %p216 = scmp.eq.s32.totalorder %s25, 0
    %p217 = por %p215, %p216
    %p218 = scmp.ne.s32.totalorder %s206, %s207
    %p219 = scmp.eq.s32.totalorder %s26, 1
    %p220 = por %p218, %p219
    %p222 = scmp.ne.s32.totalorder %s207, %s221
    %p223 = scmp.eq.s32.totalorder %s26, 0
    %p224 = por %p222, %p223
    %s226 = sadd.s32 %s225, 1
    %p229 = scmp.eq.s32.totalorder %s20, 1
    %p230 = scmp.ne.s32.totalorder %s225, %s227
    %p231 = scmp.eq.s32.totalorder %s20, 0
    %p232 = por %p230, %p231
    %p233 = scmp.ne.s32.totalorder %s225, %s227
    %p234 = scmp.eq.s32.totalorder %s25, 1
    %p235 = por %p233, %p234
    %p236 = scmp.ne.s32.totalorder %s227, %s228
    %p237 = scmp.eq.s32.totalorder %s25, 0
    %p238 = por %p236, %p237
    %p239 = scmp.ne.s32.totalorder %s227, %s228
    %p240 = scmp.eq.s32.totalorder %s26, 1
    %p241 = por %p239, %p240
    %p243 = scmp.ne.s32.totalorder %s228, %s242
    %p244 = scmp.eq.s32.totalorder %s26, 0
    %p245 = por %p243, %p244
    %s247 = sadd.s32 %s246, 1
    %p250 = scmp.eq.s32.totalorder %s20, 1
    %p251 = scmp.ne.s32.totalorder %s246, %s248
    %p252 = scmp.eq.s32.totalorder %s20, 0
    %p253 = por %p251, %p252
    %p254 = scmp.ne.s32.totalorder %s246, %s248
    %p255 = scmp.eq.s32.totalorder %s25, 1
    %p256 = por %p254, %p255
    %p257 = scmp.ne.s32.totalorder %s248, %s249
    %p258 = scmp.eq.s32.totalorder %s25, 0
    %p259 = por %p257, %p258
    %p260 = scmp.ne.s32.totalorder %s248, %s249
    %p261 = scmp.eq.s32.totalorder %s26, 1
    %p262 = por %p260, %p261
    %p264 = scmp.ne.s32.totalorder %s249, %s263
    %p265 = scmp.eq.s32.totalorder %s26, 0
    %p266 = por %p264, %p265
    %s268 = sadd.s32 %s267, 1
    %p271 = scmp.eq.s32.totalorder %s20, 1
    %p272 = scmp.ne.s32.totalorder %s267, %s269
    %p273 = scmp.eq.s32.totalorder %s20, 0
    %p274 = por %p272, %p273
    %p275 = scmp.ne.s32.totalorder %s267, %s269
    %p276 = scmp.eq.s32.totalorder %s25, 1
    %p277 = por %p275, %p276
    %p278 = scmp.ne.s32.totalorder %s269, %s270
    %p279 = scmp.eq.s32.totalorder %s25, 0
    %p280 = por %p278, %p279
    %p281 = scmp.ne.s32.totalorder %s269, %s270
    %p282 = scmp.eq.s32.totalorder %s26, 1
    %p283 = por %p281, %p282
    %p285 = scmp.ne.s32.totalorder %s270, %s284
    %p286 = scmp.eq.s32.totalorder %s26, 0
    %p287 = por %p285, %p286
    %s288 = ssub.s32 %s27, %s39
    %s289 = ssub.s32 %s28, %s35
    %s290 = sor.u32 %s288, %s289
    %p291 = scmp.eq.s32.totalorder %s290, 0
    %s293 = sadd.s32 %s292, 1
    %s294 = scalar_select %p291, %s292, %s293
    %p297 = pneg %p291
    %p298 = scmp.eq.s32.totalorder %s20, 1
    %p299 = por %p297, %p298
    %p300 = scmp.ne.s32.totalorder %s292, %s295
    %p301 = scmp.eq.s32.totalorder %s20, 0
    %p302 = por %p300, %p301
    %p303 = scmp.ne.s32.totalorder %s292, %s295
    %p304 = scmp.eq.s32.totalorder %s25, 1
    %p305 = por %p303, %p304
    %p306 = scmp.ne.s32.totalorder %s295, %s296
    %p307 = scmp.eq.s32.totalorder %s25, 0
    %p308 = por %p306, %p307
    %p309 = scmp.ne.s32.totalorder %s295, %s296
    %p310 = scmp.eq.s32.totalorder %s26, 1
    %p311 = por %p309, %p310
    %p313 = scmp.ne.s32.totalorder %s296, %s312
    %p314 = scmp.eq.s32.totalorder %s26, 0
    %p315 = por %p313, %p314
    %s316 = ssub.s32 %s27, %s39
    %s317 = ssub.s32 %s28, %s35
    %s318 = sor.u32 %s316, %s317
    %p319 = scmp.eq.s32.totalorder %s318, 0
    %s321 = sadd.s32 %s320, 1
    %s322 = scalar_select %p319, %s320, %s321
    %p325 = pneg %p319
    %p326 = scmp.eq.s32.totalorder %s20, 1
    %p327 = por %p325, %p326
    %p328 = scmp.ne.s32.totalorder %s320, %s323
    %p329 = scmp.eq.s32.totalorder %s20, 0
    %p330 = por %p328, %p329
    %p331 = scmp.ne.s32.totalorder %s320, %s323
    %p332 = scmp.eq.s32.totalorder %s25, 1
    %p333 = por %p331, %p332
    %p334 = scmp.ne.s32.totalorder %s323, %s324
    %p335 = scmp.eq.s32.totalorder %s25, 0
    %p336 = por %p334, %p335
    %p337 = scmp.ne.s32.totalorder %s323, %s324
    %p338 = scmp.eq.s32.totalorder %s26, 1
    %p339 = por %p337, %p338
    %p341 = scmp.ne.s32.totalorder %s324, %s340
    %p342 = scmp.eq.s32.totalorder %s26, 0
    %p343 = por %p341, %p342
    %s344 = ssub.s32 %s27, %s39
    %s345 = ssub.s32 %s28, %s35
    %s346 = sor.u32 %s344, %s345
    %p347 = scmp.eq.s32.totalorder %s346, 0
    %s349 = sadd.s32 %s348, 1
    %s350 = scalar_select %p347, %s348, %s349
    %p353 = pneg %p347
    %p354 = scmp.eq.s32.totalorder %s20, 1
    %p355 = por %p353, %p354
    %p356 = scmp.ne.s32.totalorder %s348, %s351
    %p357 = scmp.eq.s32.totalorder %s20, 0
    %p358 = por %p356, %p357
    %p359 = scmp.ne.s32.totalorder %s348, %s351
    %p360 = scmp.eq.s32.totalorder %s25, 1
    %p361 = por %p359, %p360
    %p362 = scmp.ne.s32.totalorder %s351, %s352
    %p363 = scmp.eq.s32.totalorder %s25, 0
    %p364 = por %p362, %p363
    %p365 = scmp.ne.s32.totalorder %s351, %s352
    %p366 = scmp.eq.s32.totalorder %s26, 1
    %p367 = por %p365, %p366
    %p369 = scmp.ne.s32.totalorder %s352, %s368
    %p370 = scmp.eq.s32.totalorder %s26, 0
    %p371 = por %p369, %p370
    %p372 = scmp.le.s32.totalorder 1, %s20
    %p373 = scmp.lt.s32.totalorder %s20, 3
    %p374 = pnand %p372, %p373
    %p375 = pneg %p374
    // Predicated region
    $region9: #{dit_block.3} parent=5 // pred_check
      _
    $region10: #{dit_block.3} parent=5 // pred_check_branch
      %377 = sbr.rel (%p374) target = $region12
    $region11: #{dit_block.3} parent=5 // pred_region
      %s378 = ssub.s32 %s20, 1
      // Predicated region
      $region13: #{dit_block.3} parent=11 // pred_check
        %p379 = pneg %p133
      $region14: #{dit_block.3} parent=11 // pred_check_branch
        %381 = sbr.rel (%p379) target = $region16
      $region15: #{dit_block.3} parent=11 // pred_region
        _
      $region16: #{dit_block.3} parent=11 // pred_fallthru
        _
      // Predicated region
      $region17: #{dit_block.3} parent=11 // pred_check
        %p382 = pneg %p154
      $region18: #{dit_block.3} parent=11 // pred_check_branch
        %384 = sbr.rel (%p382) target = $region20
      $region19: #{dit_block.3} parent=11 // pred_region
        _
      $region20: #{dit_block.3} parent=11 // pred_fallthru
        _
      // Predicated region
      $region21: #{dit_block.3} parent=11 // pred_check
        %p385 = pneg %p175
      $region22: #{dit_block.3} parent=11 // pred_check_branch
        %387 = sbr.rel (%p385) target = $region24
      $region23: #{dit_block.3} parent=11 // pred_region
        _
      $region24: #{dit_block.3} parent=11 // pred_fallthru
        _
      // Predicated region
      $region25: #{dit_block.3} parent=11 // pred_check
        %p388 = pneg %p196
      $region26: #{dit_block.3} parent=11 // pred_check_branch
        %390 = sbr.rel (%p388) target = $region28
      $region27: #{dit_block.3} parent=11 // pred_region
        _
      $region28: #{dit_block.3} parent=11 // pred_fallthru
        _
      // Predicated region
      $region29: #{dit_block.3} parent=11 // pred_check
        %p391 = pneg %p217
      $region30: #{dit_block.3} parent=11 // pred_check_branch
        %393 = sbr.rel (%p391) target = $region32
      $region31: #{dit_block.3} parent=11 // pred_region
        _
      $region32: #{dit_block.3} parent=11 // pred_fallthru
        _
      // Predicated region
      $region33: #{dit_block.3} parent=11 // pred_check
        %p394 = pneg %p238
      $region34: #{dit_block.3} parent=11 // pred_check_branch
        %396 = sbr.rel (%p394) target = $region36
      $region35: #{dit_block.3} parent=11 // pred_region
        _
      $region36: #{dit_block.3} parent=11 // pred_fallthru
        _
      // Predicated region
      $region37: #{dit_block.3} parent=11 // pred_check
        %p397 = pneg %p259
      $region38: #{dit_block.3} parent=11 // pred_check_branch
        %399 = sbr.rel (%p397) target = $region40
      $region39: #{dit_block.3} parent=11 // pred_region
        _
      $region40: #{dit_block.3} parent=11 // pred_fallthru
        _
      // Predicated region
      $region41: #{dit_block.3} parent=11 // pred_check
        %p400 = pneg %p280
      $region42: #{dit_block.3} parent=11 // pred_check_branch
        %402 = sbr.rel (%p400) target = $region44
      $region43: #{dit_block.3} parent=11 // pred_region
        _
      $region44: #{dit_block.3} parent=11 // pred_fallthru
        _
    $region12: #{dit_block.3} parent=5 // pred_fallthru
      _
    %p403 = scmp.lt.s32.totalorder %s20, 2
    // Predicated region
    $region45: #{dit_block.3} parent=5 // pred_check
      %p404 = pneg %p403
    $region46: #{dit_block.3} parent=5 // pred_check_branch
      %406 = sbr.rel (%p404) target = $region48
    $region47: #{dit_block.3} parent=5 // pred_region
      // Predicated region
      $region49: #{dit_block.3} parent=47 // pred_check
        %p407 = pneg %p54
      $region50: #{dit_block.3} parent=47 // pred_check_branch
        %409 = sbr.rel (%p407) target = $region52
      $region51: #{dit_block.3} parent=47 // pred_region
        %p410 = scmp.lt.s32.totalorder %s27, 1
        %s411 = scalar_select %p410, %s27, 1
        %p412 = scmp.lt.s32.totalorder %s28, 0
        %s413 = scalar_select %p412, %s28, 0
        %s414 = sadd.s32 %s413, %s411
        %s415 = smul.addr %s414, 8
        %s416 = scalar_lea.vmem %s0, %s415
      $region52: #{dit_block.3} parent=47 // pred_fallthru
        _
      // Predicated region
      $region53: #{dit_block.3} parent=47 // pred_check
        %p417 = pneg %p80
      $region54: #{dit_block.3} parent=47 // pred_check_branch
        %419 = sbr.rel (%p417) target = $region56
      $region55: #{dit_block.3} parent=47 // pred_region
        %p420 = scmp.lt.s32.totalorder %s27, 1
        %s421 = scalar_select %p420, %s27, 1
        %s422 = scalar_lea.vmem %s1, %s421
      $region56: #{dit_block.3} parent=47 // pred_fallthru
        _
      // Predicated region
      $region57: #{dit_block.3} parent=47 // pred_check
        %p423 = pneg %p106
      $region58: #{dit_block.3} parent=47 // pred_check_branch
        %425 = sbr.rel (%p423) target = $region60
      $region59: #{dit_block.3} parent=47 // pred_region
        %p426 = scmp.lt.s32.totalorder %s27, 1
        %s427 = scalar_select %p426, %s27, 1
        %s428 = scalar_lea.vmem %s2, %s427
      $region60: #{dit_block.3} parent=47 // pred_fallthru
        _
    $region48: #{dit_block.3} parent=5 // pred_fallthru
      _
    %p429 = scmp.le.s32.totalorder 1, %s20
    %p430 = scmp.lt.s32.totalorder %s20, 3
    %p431 = pnand %p429, %p430
    %p432 = pneg %p431
    // Predicated region
    $region61: #{dit_block.3} parent=5 // pred_check
      _
    $region62: #{dit_block.3} parent=5 // pred_check_branch
      %434 = sbr.rel (%p431) target = $region64
    $region63: #{dit_block.3} parent=5 // pred_region
      %s435 = ssub.s32 %s20, 1
      %p436 = scmp.lt.s32.totalorder %s29, 1
      %s437 = scalar_select %p436, %s29, 1
      %p438 = scmp.lt.s32.totalorder %s30, 0
      %s439 = scalar_select %p438, %s30, 0
      %s440 = sadd.s32 %s439, %s437
      %s441 = smul.addr %s440, 8
      %s442 = scalar_lea.vmem %s0, %s441
      %p443 = pneg %p60
      %p444 = pneg %p57
      %p445 = scmp.lt.s32.totalorder %s29, 1
      %s446 = scalar_select %p445, %s29, 1
      %s447 = scalar_lea.vmem %s1, %s446
      %p448 = pneg %p86
      %p449 = pneg %p83
      %p450 = scmp.lt.s32.totalorder %s29, 1
      %s451 = scalar_select %p450, %s29, 1
      %s452 = scalar_lea.vmem %s2, %s451
      %p453 = pneg %p112
      %p454 = pneg %p109
      %p455 = pneg %p133
      %p456 = pneg %p130
      %p457 = pneg %p154
      %p458 = pneg %p151
      %p459 = pneg %p175
      %p460 = pneg %p172
      %p461 = pneg %p196
      %p462 = pneg %p193
      %p463 = pneg %p217
      %p464 = pneg %p214
      %p465 = pneg %p238
      %p466 = pneg %p235
      %p467 = pneg %p259
      %p468 = pneg %p256
      %p469 = pneg %p280
      %p470 = pneg %p277
      %p471 = pneg %p308
      %p472 = pneg %p305
      %p473 = scmp.lt.s32.totalorder %s29, 1
      %s474 = scalar_select %p473, %s29, 1
      %p475 = scmp.lt.s32.totalorder %s30, 0
      %s476 = scalar_select %p475, %s30, 0
      %s477 = sadd.s32 %s476, %s474
      %s478 = smul.addr %s477, 8
      %s479 = scalar_lea.vmem %s11, %s478
      %p480 = pneg %p336
      %p481 = pneg %p333
      %p482 = scmp.lt.s32.totalorder %s29, 1
      %s483 = scalar_select %p482, %s29, 1
      %p484 = scmp.lt.s32.totalorder %s30, 0
      %s485 = scalar_select %p484, %s30, 0
      %s486 = sadd.s32 %s485, %s483
      %s487 = smul.addr %s486, 8
      %s488 = scalar_lea.vmem %s12, %s487
      %p489 = pneg %p364
      %p490 = pneg %p361
      %p491 = scmp.lt.s32.totalorder %s29, 1
      %s492 = scalar_select %p491, %s29, 1
      %p493 = scmp.lt.s32.totalorder %s30, 0
      %s494 = scalar_select %p493, %s30, 0
      %s495 = sadd.s32 %s494, %s492
      %s496 = smul.addr %s495, 8
      %s497 = scalar_lea.vmem %s13, %s496
      %p498 = scmp.lt.s32.totalorder %s29, 1
      %s499 = scalar_select %p498, %s29, 1
      %p500 = scmp.lt.s32.totalorder %s30, 0
      %s501 = scalar_select %p500, %s30, 0
      %s502 = sadd.s32 %s501, %s499
      %s503 = smul.addr %s502, 8
      %s504 = scalar_lea.vmem %s0, %s503
      %p505 = scmp.lt.s32.totalorder %s29, 1
      %s506 = scalar_select %p505, %s29, 1
      %s507 = scalar_lea.vmem %s1, %s506
      %p508 = scmp.lt.s32.totalorder %s29, 1
      %s509 = scalar_select %p508, %s29, 1
      %s510 = scalar_lea.vmem %s2, %s509
      %p511 = scmp.lt.s32.totalorder %s29, 1
      %s512 = scalar_select %p511, %s29, 1
      %p513 = scmp.lt.s32.totalorder %s30, 0
      %s514 = scalar_select %p513, %s30, 0
      %s515 = sadd.s32 %s514, %s512
      %s516 = smul.addr %s515, 8
      %s517 = scalar_lea.vmem %s11, %s516
      %p518 = scmp.lt.s32.totalorder %s29, 1
      %s519 = scalar_select %p518, %s29, 1
      %p520 = scmp.lt.s32.totalorder %s30, 0
      %s521 = scalar_select %p520, %s30, 0
      %s522 = sadd.s32 %s521, %s519
      %s523 = smul.addr %s522, 8
      %s524 = scalar_lea.vmem %s12, %s523
      %p525 = scmp.lt.s32.totalorder %s29, 1
      %s526 = scalar_select %p525, %s29, 1
      %p527 = scmp.lt.s32.totalorder %s30, 0
      %s528 = scalar_select %p527, %s30, 0
      %s529 = sadd.s32 %s528, %s526
      %s530 = smul.addr %s529, 8
      %s531 = scalar_lea.vmem %s13, %s530
      %v532 = vld [vmem:[%s504] sm:$0xff]
      %v533 = vld [vmem:[%s507] sm:$0x1]
      %v534 = vld [vmem:[%s510] sm:$0x1]
      %vm535 = vcmask 261120
      %v536 = vsel %vm535, %v532, 0.0
      %537 = vadd.xlane.f32.xlu0 %v536
      %v538 = vpop.xlane.xlu0 %537
      %v539 = vrcp.pop 32.0
      %v540 = vmul.f32 32.0, %v539
      %v541 = vsub.f32 1.0, %v540
      %v542 = vmul.f32 %v539, %v541
      %v543 = vadd.f32 %v539, %v542
      %vm544 = vweird.f32 %v539
      %v545 = vsel %vm544, %v539, %v543
      %v546 = vmul.f32 %v538, %v545
      %v547 = vmul.f32 %v532, %v532
      %v548 = vsel %vm535, %v547, 0.0
      %549 = vadd.xlane.f32.xlu0 %v548
      %v550 = vpop.xlane.xlu0 %549
      %v551 = vmul.f32 %v550, %v545
      %v552 = vsub.f32 %v532, %v546
      %v553 = vmul.f32 %v546, %v546
      %v554 = vsub.f32 %v551, %v553
      %v555 = vadd.f32 %v554, 1e-06
      %v556 = vrsqrt.pop %v555
      %v557 = vmul.f32 %v556, %v555
      %v558 = vmul.f32 %v557, %v556
      %v559 = vmul.f32 0.5, %v558
      %v560 = vsub.f32 1.5, %v559
      %v561 = vmul.f32 %v556, %v560
      %vm562 = vweird.f32 %v555
      %vm563 = vweird.f32 %v556
      %vm564 = vmor %vm562, %vm563
      %v565 = vsel %vm564, %v556, %v561
      %v566 = vmul.f32 %v552, %v565
      %v567 = vadd.f32 %v533, 1.0
      %v569 = vperm.slane %v567, 0
      %v571 = vmul.f32 %v566, %v569
      %v573 = vperm.slane %v534, 0
      %v575 = vadd.f32 %v571, %v573
      %v576 = vld [vmem:[%s3] sm:$0xff]
      %v577 = vld [vmem:[%s3 + $0x8] sm:$0xff]
      %v578 = vld [vmem:[%s3 + $0x10] sm:$0xff]
      %v579 = vld [vmem:[%s3 + $0x18] sm:$0xff]
      %v580 = vld [vmem:[%s4] sm:$0x1]
      %v582 = vperm.slane %v580, 0
      %v585 = vsel %vm535, %v575, 0
      %587 = vmatpush.msra.mxu0 0.0
      %588 = vmatpush.msra.mxu0 0.0
      %589 = vmatpush.msra.mxu0 0.0
      %590 = vmatpush.msra.mxu0 0.0
      %591 = vmatpush.msra.mxu0 0.0
      %592 = vmatpush.msra.mxu0 0.0
      %593 = vmatpush.msra.mxu0 0.0
      %594 = vmatpush.msra.mxu0 0.0
      %595 = vmatpush.msra.mxu0 0.0
      %596 = vmatpush.msra.mxu0 0.0
      %597 = vmatpush.msra.mxu0 0.0
      %598 = vmatpush.msra.mxu0 0.0
      %599 = vmatpush.msra.mxu0 %v579
      %600 = vmatpush.msra.mxu0 %v578
      %601 = vmatpush.msra.mxu0 %v577
      %602 = vmatpush.msra.mxu0 %v576
      %603 = vmatmul.f32.gmra.mxu0 %v585
      %v604 = vpop.f32.mrf.mxu0
      %v605 = vadd.f32 %v582, %v604
      %606 = vdwg.mxu0
      %v607 = vld [vmem:[%s5] sm:$0xff]
      %v608 = vld [vmem:[%s5 + $0x8] sm:$0xff]
      %v609 = vld [vmem:[%s5 + $0x10] sm:$0xff]
      %v610 = vld [vmem:[%s5 + $0x18] sm:$0xff]
      %v611 = vld [vmem:[%s6] sm:$0x1]
      %v613 = vperm.slane %v611, 0
      %615 = vmatpush.msra.mxu0 0.0
      %616 = vmatpush.msra.mxu0 0.0
      %617 = vmatpush.msra.mxu0 0.0
      %618 = vmatpush.msra.mxu0 0.0
      %619 = vmatpush.msra.mxu0 0.0
      %620 = vmatpush.msra.mxu0 0.0
      %621 = vmatpush.msra.mxu0 0.0
      %622 = vmatpush.msra.mxu0 0.0
      %623 = vmatpush.msra.mxu0 0.0
      %624 = vmatpush.msra.mxu0 0.0
      %625 = vmatpush.msra.mxu0 0.0
      %626 = vmatpush.msra.mxu0 0.0
      %627 = vmatpush.msra.mxu0 %v610
      %628 = vmatpush.msra.mxu0 %v609
      %629 = vmatpush.msra.mxu0 %v608
      %630 = vmatpush.msra.mxu0 %v607
      %631 = vmatmul.f32.gmra.mxu0 %v585
      %v632 = vpop.f32.mrf.mxu0
      %v633 = vadd.f32 %v613, %v632
      %634 = vdwg.mxu0
      %v635 = vld [vmem:[%s7] sm:$0xff]
      %v636 = vld [vmem:[%s7 + $0x8] sm:$0xff]
      %v637 = vld [vmem:[%s7 + $0x10] sm:$0xff]
      %v638 = vld [vmem:[%s7 + $0x18] sm:$0xff]
      %v639 = vld [vmem:[%s8] sm:$0x1]
      %v641 = vperm.slane %v639, 0
      %643 = vmatpush.msra.mxu0 0.0
      %644 = vmatpush.msra.mxu0 0.0
      %645 = vmatpush.msra.mxu0 0.0
      %646 = vmatpush.msra.mxu0 0.0
      %647 = vmatpush.msra.mxu0 0.0
      %648 = vmatpush.msra.mxu0 0.0
      %649 = vmatpush.msra.mxu0 0.0
      %650 = vmatpush.msra.mxu0 0.0
      %651 = vmatpush.msra.mxu0 0.0
      %652 = vmatpush.msra.mxu0 0.0
      %653 = vmatpush.msra.mxu0 0.0
      %654 = vmatpush.msra.mxu0 0.0
      %655 = vmatpush.msra.mxu0 %v638
      %656 = vmatpush.msra.mxu0 %v637
      %657 = vmatpush.msra.mxu0 %v636
      %658 = vmatpush.msra.mxu0 %v635
      %659 = vmatmul.f32.gmra.mxu0 %v585
      %v660 = vpop.f32.mrf.mxu0
      %v661 = vadd.f32 %v641, %v660
      %662 = vdwg.mxu0
      %v663 = vlaneseq
      %v664 = vshrl.u32 %v663, 7
      %v665 = vadd.s32 %v664, 8
      %v666 = vadd.s32 %v664, 16
      %v667 = vadd.s32 %v664, 24
      %v668 = vlaneseq
      %v669 = vand.u32 %v668, 127
      %v670 = vmul.u32 %v669, 8
      %vm671 = vcmp.ge.s32.totalorder %v664, %v670
      %vm672 = vcmp.ge.s32.totalorder %v665, %v670
      %vm673 = vcmp.ge.s32.totalorder %v666, %v670
      %vm674 = vcmp.ge.s32.totalorder %v667, %v670
      %v675 = vadd.s32 %v669, 1
      %v676 = vmul.u32 %v675, 8
      %vm677 = vcmp.lt.s32.totalorder %v664, %v676
      %vm678 = vcmp.lt.s32.totalorder %v665, %v676
      %vm679 = vcmp.lt.s32.totalorder %v666, %v676
      %vm680 = vcmp.lt.s32.totalorder %v667, %v676
      %vm681 = vmand %vm671, %vm677
      %vm682 = vmand %vm672, %vm678
      %vm683 = vmand %vm673, %vm679
      %vm684 = vmand %vm674, %vm680
      %v685 = vsel %vm681, 1, 0
      %v686 = vsel %vm682, 1, 0
      %v687 = vsel %vm683, 1, 0
      %v688 = vsel %vm684, 1, 0
      %v689 = vcvt.s32.f32 %v685
      %v690 = vcvt.s32.f32 %v686
      %v691 = vcvt.s32.f32 %v687
      %v692 = vcvt.s32.f32 %v688
      %v693 = vmul.u32 %v664, 8
      %vm694 = vcmp.ge.s32.totalorder %v669, %v693
      %v695 = vadd.s32 %v664, 1
      %v696 = vmul.u32 %v695, 8
      %vm697 = vcmp.lt.s32.totalorder %v669, %v696
      %vm698 = vmand %vm694, %vm697
      %v699 = vsel %vm698, 1, 0
      %v700 = vcvt.s32.f32 %v699
      %v701 = vmul.f32 %v605, %v605
      %v703 = vsel %vm535, %v701, 0
      %705 = vmatpush.msra.mxu0 0.0
      %706 = vmatpush.msra.mxu0 0.0
      %707 = vmatpush.msra.mxu0 0.0
      %708 = vmatpush.msra.mxu0 0.0
      %709 = vmatpush.msra.mxu0 0.0
      %710 = vmatpush.msra.mxu0 0.0
      %711 = vmatpush.msra.mxu0 0.0
      %712 = vmatpush.msra.mxu0 0.0
      %713 = vmatpush.msra.mxu0 0.0
      %714 = vmatpush.msra.mxu0 0.0
      %715 = vmatpush.msra.mxu0 0.0
      %716 = vmatpush.msra.mxu0 0.0
      %717 = vmatpush.msra.mxu0 %v692
      %718 = vmatpush.msra.mxu0 %v691
      %719 = vmatpush.msra.mxu0 %v690
      %720 = vmatpush.msra.mxu0 %v689
      %721 = vmatmul.f32.gmra.mxu0 %v703
      %v722 = vpop.f32.mrf.mxu0
      %v723 = vadd.f32 0.0, %v722
      %724 = vdwg.mxu0
      %v725 = vmul.f32 %v723, 0.125
      %v726 = vadd.f32 %v725, 1e-06
      %v727 = vrsqrt.pop %v726
      %v728 = vmul.f32 %v727, %v726
      %v729 = vmul.f32 %v728, %v727
      %v730 = vmul.f32 0.5, %v729
      %v731 = vsub.f32 1.5, %v730
      %v732 = vmul.f32 %v727, %v731
      %vm733 = vweird.f32 %v726
      %vm734 = vweird.f32 %v727
      %vm735 = vmor %vm733, %vm734
      %v736 = vsel %vm735, %v727, %v732
      %vm737 = vcmask 31744
      %v739 = vsel %vm737, %v736, 0
      %vm741 = vcmask 1043456
      %v743 = vsel %vm741, %v700, 0
      %745 = vmatpush.msra.mxu0 0.0
      %746 = vmatpush.msra.mxu0 0.0
      %747 = vmatpush.msra.mxu0 0.0
      %748 = vmatpush.msra.mxu0 0.0
      %749 = vmatpush.msra.mxu0 0.0
      %750 = vmatpush.msra.mxu0 0.0
      %751 = vmatpush.msra.mxu0 0.0
      %752 = vmatpush.msra.mxu0 0.0
      %753 = vmatpush.msra.mxu0 0.0
      %754 = vmatpush.msra.mxu0 0.0
      %755 = vmatpush.msra.mxu0 0.0
      %756 = vmatpush.msra.mxu0 0.0
      %757 = vmatpush.msra.mxu0 0.0
      %758 = vmatpush.msra.mxu0 0.0
      %759 = vmatpush.msra.mxu0 0.0
      %760 = vmatpush.msra.mxu0 %v743
      %761 = vmatmul.f32.gmra.mxu0 %v739
      %v762 = vpop.f32.mrf.mxu0
      %v763 = vadd.f32 0.0, %v762
      %764 = vdwg.mxu0
      %v765 = vmul.f32 %v605, %v763
      %v766 = vld [vmem:[%s9] sm:$0x1]
      %v768 = vperm.slane %v766, 0
      %v770 = vmul.f32 %v765, %v768
      %771 = vst.msk [vmem:[%s517] sm:$0xff] %vm535, %v770
      %v772 = vmul.f32 %v633, %v633
      %v774 = vsel %vm535, %v772, 0
      %776 = vmatpush.msra.mxu0 0.0
      %777 = vmatpush.msra.mxu0 0.0
      %778 = vmatpush.msra.mxu0 0.0
      %779 = vmatpush.msra.mxu0 0.0
      %780 = vmatpush.msra.mxu0 0.0
      %781 = vmatpush.msra.mxu0 0.0
      %782 = vmatpush.msra.mxu0 0.0
      %783 = vmatpush.msra.mxu0 0.0
      %784 = vmatpush.msra.mxu0 0.0
      %785 = vmatpush.msra.mxu0 0.0
      %786 = vmatpush.msra.mxu0 0.0
      %787 = vmatpush.msra.mxu0 0.0
      %788 = vmatpush.msra.mxu0 %v692
      %789 = vmatpush.msra.mxu0 %v691
      %790 = vmatpush.msra.mxu0 %v690
      %791 = vmatpush.msra.mxu0 %v689
      %792 = vmatmul.f32.gmra.mxu0 %v774
      %v793 = vpop.f32.mrf.mxu0
      %v794 = vadd.f32 0.0, %v793
      %795 = vdwg.mxu0
      %v796 = vmul.f32 %v794, 0.125
      %v797 = vadd.f32 %v796, 1e-06
      %v798 = vrsqrt.pop %v797
      %v799 = vmul.f32 %v798, %v797
      %v800 = vmul.f32 %v799, %v798
      %v801 = vmul.f32 0.5, %v800
      %v802 = vsub.f32 1.5, %v801
      %v803 = vmul.f32 %v798, %v802
      %vm804 = vweird.f32 %v797
      %vm805 = vweird.f32 %v798
      %vm806 = vmor %vm804, %vm805
      %v807 = vsel %vm806, %v798, %v803
      %v809 = vsel %vm737, %v807, 0
      %811 = vmatpush.msra.mxu0 0.0
      %812 = vmatpush.msra.mxu0 0.0
      %813 = vmatpush.msra.mxu0 0.0
      %814 = vmatpush.msra.mxu0 0.0
      %815 = vmatpush.msra.mxu0 0.0
      %816 = vmatpush.msra.mxu0 0.0
      %817 = vmatpush.msra.mxu0 0.0
      %818 = vmatpush.msra.mxu0 0.0
      %819 = vmatpush.msra.mxu0 0.0
      %820 = vmatpush.msra.mxu0 0.0
      %821 = vmatpush.msra.mxu0 0.0
      %822 = vmatpush.msra.mxu0 0.0
      %823 = vmatpush.msra.mxu0 0.0
      %824 = vmatpush.msra.mxu0 0.0
      %825 = vmatpush.msra.mxu0 0.0
      %826 = vmatpush.msra.mxu0 %v743
      %827 = vmatmul.f32.gmra.mxu0 %v809
      %v828 = vpop.f32.mrf.mxu0
      %v829 = vadd.f32 0.0, %v828
      %830 = vdwg.mxu0
      %v831 = vmul.f32 %v633, %v829
      %v832 = vld [vmem:[%s10] sm:$0x1]
      %v834 = vperm.slane %v832, 0
      %v836 = vmul.f32 %v831, %v834
      %837 = vst.msk [vmem:[%s524] sm:$0xff] %vm535, %v836
      %838 = vst.msk [vmem:[%s531] sm:$0xff] %vm535, %v661
      %p839 = scmp.lt.s32.totalorder %s29, 1
      %s840 = scalar_select %p839, %s29, 1
      %p841 = scmp.lt.s32.totalorder %s30, 0
      %s842 = scalar_select %p841, %s30, 0
      %s843 = sadd.s32 %s842, %s840
      %s844 = smul.addr %s843, 8
      %s845 = scalar_lea.vmem %s11, %s844
      %p846 = scmp.lt.s32.totalorder %s29, 1
      %s847 = scalar_select %p846, %s29, 1
      %p848 = scmp.lt.s32.totalorder %s30, 0
      %s849 = scalar_select %p848, %s30, 0
      %s850 = sadd.s32 %s849, %s847
      %s851 = smul.addr %s850, 8
      %s852 = scalar_lea.vmem %s12, %s851
      %p853 = scmp.lt.s32.totalorder %s29, 1
      %s854 = scalar_select %p853, %s29, 1
      %p855 = scmp.lt.s32.totalorder %s30, 0
      %s856 = scalar_select %p855, %s30, 0
      %s857 = sadd.s32 %s856, %s854
      %s858 = smul.addr %s857, 8
      %s859 = scalar_lea.vmem %s13, %s858
      // Predicated region
      $region65: #{dit_block.3} parent=63 // pred_check
        %p860 = pneg %p305
      $region66: #{dit_block.3} parent=63 // pred_check_branch
        %862 = sbr.rel (%p860) target = $region68
      $region67: #{dit_block.3} parent=63 // pred_region
        _
      $region68: #{dit_block.3} parent=63 // pred_fallthru
        _
      // Predicated region
      $region69: #{dit_block.3} parent=63 // pred_check
        %p863 = pneg %p333
      $region70: #{dit_block.3} parent=63 // pred_check_branch
        %865 = sbr.rel (%p863) target = $region72
      $region71: #{dit_block.3} parent=63 // pred_region
        _
      $region72: #{dit_block.3} parent=63 // pred_fallthru
        _
      // Predicated region
      $region73: #{dit_block.3} parent=63 // pred_check
        %p866 = pneg %p361
      $region74: #{dit_block.3} parent=63 // pred_check_branch
        %868 = sbr.rel (%p866) target = $region76
      $region75: #{dit_block.3} parent=63 // pred_region
        _
      $region76: #{dit_block.3} parent=63 // pred_fallthru
        _
    $region64: #{dit_block.3} parent=5 // pred_fallthru
      _
    %p869 = scmp.le.s32.totalorder 2, %s20
    // Predicated region
    $region77: #{dit_block.3} parent=5 // pred_check
      %p870 = pneg %p869
    $region78: #{dit_block.3} parent=5 // pred_check_branch
      %872 = sbr.rel (%p870) target = $region80
    $region79: #{dit_block.3} parent=5 // pred_region
      %s873 = ssub.s32 %s20, 2
      // Predicated region
      $region81: #{dit_block.3} parent=79 // pred_check
        %p874 = pneg %p311
      $region82: #{dit_block.3} parent=79 // pred_check_branch
        %876 = sbr.rel (%p874) target = $region84
      $region83: #{dit_block.3} parent=79 // pred_region
        %p877 = scmp.lt.s32.totalorder %s31, 1
        %s878 = scalar_select %p877, %s31, 1
        %p879 = scmp.lt.s32.totalorder %s32, 0
        %s880 = scalar_select %p879, %s32, 0
        %s881 = sadd.s32 %s880, %s878
        %s882 = smul.addr %s881, 8
        %s883 = scalar_lea.vmem %s11, %s882
      $region84: #{dit_block.3} parent=79 // pred_fallthru
        _
      // Predicated region
      $region85: #{dit_block.3} parent=79 // pred_check
        %p884 = pneg %p339
      $region86: #{dit_block.3} parent=79 // pred_check_branch
        %886 = sbr.rel (%p884) target = $region88
      $region87: #{dit_block.3} parent=79 // pred_region
        %p887 = scmp.lt.s32.totalorder %s31, 1
        %s888 = scalar_select %p887, %s31, 1
        %p889 = scmp.lt.s32.totalorder %s32, 0
        %s890 = scalar_select %p889, %s32, 0
        %s891 = sadd.s32 %s890, %s888
        %s892 = smul.addr %s891, 8
        %s893 = scalar_lea.vmem %s12, %s892
      $region88: #{dit_block.3} parent=79 // pred_fallthru
        _
      // Predicated region
      $region89: #{dit_block.3} parent=79 // pred_check
        %p894 = pneg %p367
      $region90: #{dit_block.3} parent=79 // pred_check_branch
        %896 = sbr.rel (%p894) target = $region92
      $region91: #{dit_block.3} parent=79 // pred_region
        %p897 = scmp.lt.s32.totalorder %s31, 1
        %s898 = scalar_select %p897, %s31, 1
        %p899 = scmp.lt.s32.totalorder %s32, 0
        %s900 = scalar_select %p899, %s32, 0
        %s901 = sadd.s32 %s900, %s898
        %s902 = smul.addr %s901, 8
        %s903 = scalar_lea.vmem %s13, %s902
      $region92: #{dit_block.3} parent=79 // pred_fallthru
        _
    $region80: #{dit_block.3} parent=5 // pred_fallthru
      _
  $region6: #{dit_block.3} parent=0 // loop_footer
    %s24 = sadd.s32 1, %s20
  $region7: #{dit_block.3} parent=0 // loop_footer_branch
    %19 = sbr.rel target = $region3
  $region8: #{dit_block.3} parent=0 // loop_exit
    _

// kernel: dit_block.5
$region0: #{dit_block.5}
  #allocation0 [shape = 'u32[]', space=smem, size = 0x4, offset = 0x4, fixed_abs, tag = 'smem constant byte address 0x4 - core index']
  #allocation1 [shape = 'u32[72,128]{1,0:T(1,128)}', space=vmem, size = 0x9000, scoped, tag = 'internal scratch']
  %s0 = inlined_call_operand.vmem [shape: f32[2,8,32], index: 0, kind: input, shape index: {}]
  %s1 = inlined_call_operand.vmem [shape: f32[2,8,32], index: 1, kind: input, shape index: {}]
  %s2 = inlined_call_operand.vmem [shape: f32[2,1,32], index: 2, kind: input, shape index: {}]
  %s3 = inlined_call_operand.vmem [shape: f32[2,1,32], index: 3, kind: input, shape index: {}]
  %s4 = inlined_call_operand.vmem [shape: f32[2,1,32], index: 4, kind: input, shape index: {}]
  %s5 = inlined_call_operand.vmem [shape: f32[2,1,32], index: 5, kind: input, shape index: {}]
  %s6 = inlined_call_operand.vmem [shape: f32[32,32], index: 6, kind: input, shape index: {}]
  %s7 = inlined_call_operand.vmem [shape: f32[1,32], index: 7, kind: input, shape index: {}]
  %s8 = inlined_call_operand.vmem [shape: f32[32,128], index: 8, kind: input, shape index: {}]
  %s9 = inlined_call_operand.vmem [shape: f32[1,128], index: 9, kind: input, shape index: {}]
  %s10 = inlined_call_operand.vmem [shape: f32[128,32], index: 10, kind: input, shape index: {}]
  %s11 = inlined_call_operand.vmem [shape: f32[1,32], index: 11, kind: input, shape index: {}]
  %s12 = inlined_call_operand.hbm [shape: f32[2,8,32], index: 12, kind: output, shape index: {}]
  %s13 = sld [smem:[#allocation0]]
  $region81: #{dit_block.5} parent=0
    _
  %s15 = ssub.s32 1, %s13
  %s16 = scalar_select 0, %s15, %s13
  $region1: #{dit_block.5} parent=0
    #allocation2 [shape = 'u8[8192]{0}', space=vmem, size = 0x2000, scoped, tag = 'output window, operand 0']
    #allocation3 [shape = 's32[2]{0}', space=sflag, size = 0x8, scoped, tag = 'scoped memory for dit_block.5']
    %17 = vsyncpa [#allocation3], 0
    %s18 = scalar_lea.sflag [#allocation3], 1
    %19 = vsyncpa %s18, 0
    loop: start=0, step=1, limit=4
    $region2: #{dit_block.5} parent=1 // loop_pre_header
      _
    $region3: #{dit_block.5} parent=1 // loop_header
      %s21 = sphi 0, %s25
      %p22 = scmp.ge.s32.totalorder %s21, 4
      %s28 = sphi 0, %s40
      %s29 = sphi 0, %s36
      %s30 = sphi 0, %s28
      %s31 = sphi 0, %s29
      %s32 = sphi 0, %s30
      %s33 = sphi 0, %s31
      %s45 = sphi 0, %s47
      %s48 = sphi 0, %s45
      %s49 = sphi 0, %s48
      %s65 = sphi 0, %s49
      %s73 = sphi 0, %s75
      %s76 = sphi 0, %s73
      %s77 = sphi 0, %s76
      %s93 = sphi 0, %s77
      %s99 = sphi 0, %s101
      %s102 = sphi 0, %s99
      %s103 = sphi 0, %s102
      %s119 = sphi 0, %s103
      %s125 = sphi 0, %s127
      %s128 = sphi 0, %s125
      %s129 = sphi 0, %s128
      %s145 = sphi 0, %s129
      %s151 = sphi 0, %s153
      %s154 = sphi 0, %s151
      %s155 = sphi 0, %s154
      %s171 = sphi 0, %s155
      %s177 = sphi 0, %s179
      %s180 = sphi 0, %s177
      %s181 = sphi 0, %s180
      %s197 = sphi 0, %s181
      %s201 = sphi 0, %s201
      %s203 = sphi 0, %s201
      %s204 = sphi 0, %s203
      %s218 = sphi 0, %s204
      %s222 = sphi 0, %s222
      %s224 = sphi 0, %s222
      %s225 = sphi 0, %s224
      %s239 = sphi 0, %s225
      %s243 = sphi 0, %s243
      %s245 = sphi 0, %s243
      %s246 = sphi 0, %s245
      %s260 = sphi 0, %s246
      %s264 = sphi 0, %s264
      %s266 = sphi 0, %s264
      %s267 = sphi 0, %s266
      %s281 = sphi 0, %s267
      %s285 = sphi 0, %s285
      %s287 = sphi 0, %s285
      %s288 = sphi 0, %s287
      %s302 = sphi 0, %s288
      %s306 = sphi 0, %s306
      %s308 = sphi 0, %s306
      %s309 = sphi 0, %s308
      %s323 = sphi 0, %s309
      %s331 = sphi 0, %s333
      %s334 = sphi 0, %s331
      %s335 = sphi 0, %s334
      %s351 = sphi 0, %s335
    $region4: #{dit_block.5} parent=1 // loop_header_branch
      %24 = sbr.rel (%p22) target = $region8
    $region5: #{dit_block.5} parent=1 // loop_body
      %s26 = ssub.s32 %s21, 1
      %s27 = ssub.s32 %s21, 2
      %s34 = sadd.s32 1, %s29
      %p35 = scmp.ge.s32.totalorder %s34, 1
      %s36 = scalar_select %p35, 0, %s34
      %s37 = sadd.s32 1, %s28
      %s38 = scalar_select %p35, %s37, %s28
      %p39 = scmp.ge.s32.totalorder %s38, 2
      %s40 = scalar_select %p39, 0, %s38
      %s41 = ssub.s32 %s28, %s40
      %s42 = ssub.s32 %s29, %s36
      %s43 = sor.u32 %s41, %s42
      %p44 = scmp.eq.s32.totalorder %s43, 0
      %s46 = sadd.s32 %s45, 1
      %s47 = scalar_select %p44, %s45, %s46
      %p50 = pneg %p44
      %p51 = scmp.eq.s32.totalorder %s21, 1
      %p52 = por %p50, %p51
      %p53 = scmp.ne.s32.totalorder %s45, %s48
      %p54 = scmp.eq.s32.totalorder %s21, 0
      %p55 = por %p53, %p54
      %p56 = scmp.ne.s32.totalorder %s45, %s48
      %p57 = scmp.eq.s32.totalorder %s26, 1
      %p58 = por %p56, %p57
      %p59 = scmp.ne.s32.totalorder %s48, %s49
      %p60 = scmp.eq.s32.totalorder %s26, 0
      %p61 = por %p59, %p60
      %p62 = scmp.ne.s32.totalorder %s48, %s49
      %p63 = scmp.eq.s32.totalorder %s27, 1
      %p64 = por %p62, %p63
      %p66 = scmp.ne.s32.totalorder %s49, %s65
      %p67 = scmp.eq.s32.totalorder %s27, 0
      %p68 = por %p66, %p67
      %s69 = ssub.s32 %s28, %s40
      %s70 = ssub.s32 %s29, %s36
      %s71 = sor.u32 %s69, %s70
      %p72 = scmp.eq.s32.totalorder %s71, 0
      %s74 = sadd.s32 %s73, 1
      %s75 = scalar_select %p72, %s73, %s74
      %p78 = pneg %p72
      %p79 = scmp.eq.s32.totalorder %s21, 1
      %p80 = por %p78, %p79
      %p81 = scmp.ne.s32.totalorder %s73, %s76
      %p82 = scmp.eq.s32.totalorder %s21, 0
      %p83 = por %p81, %p82
      %p84 = scmp.ne.s32.totalorder %s73, %s76
      %p85 = scmp.eq.s32.totalorder %s26, 1
      %p86 = por %p84, %p85
      %p87 = scmp.ne.s32.totalorder %s76, %s77
      %p88 = scmp.eq.s32.totalorder %s26, 0
      %p89 = por %p87, %p88
      %p90 = scmp.ne.s32.totalorder %s76, %s77
      %p91 = scmp.eq.s32.totalorder %s27, 1
      %p92 = por %p90, %p91
      %p94 = scmp.ne.s32.totalorder %s77, %s93
      %p95 = scmp.eq.s32.totalorder %s27, 0
      %p96 = por %p94, %p95
      %s97 = ssub.s32 %s28, %s40
      %p98 = scmp.eq.s32.totalorder %s97, 0
      %s100 = sadd.s32 %s99, 1
      %s101 = scalar_select %p98, %s99, %s100
      %p104 = pneg %p98
      %p105 = scmp.eq.s32.totalorder %s21, 1
      %p106 = por %p104, %p105
      %p107 = scmp.ne.s32.totalorder %s99, %s102
      %p108 = scmp.eq.s32.totalorder %s21, 0
      %p109 = por %p107, %p108
      %p110 = scmp.ne.s32.totalorder %s99, %s102
      %p111 = scmp.eq.s32.totalorder %s26, 1
      %p112 = por %p110, %p111
      %p113 = scmp.ne.s32.totalorder %s102, %s103
      %p114 = scmp.eq.s32.totalorder %s26, 0
      %p115 = por %p113, %p114
      %p116 = scmp.ne.s32.totalorder %s102, %s103
      %p117 = scmp.eq.s32.totalorder %s27, 1
      %p118 = por %p116, %p117
      %p120 = scmp.ne.s32.totalorder %s103, %s119
      %p121 = scmp.eq.s32.totalorder %s27, 0
      %p122 = por %p120, %p121
      %s123 = ssub.s32 %s28, %s40
      %p124 = scmp.eq.s32.totalorder %s123, 0
      %s126 = sadd.s32 %s125, 1
      %s127 = scalar_select %p124, %s125, %s126
      %p130 = pneg %p124
      %p131 = scmp.eq.s32.totalorder %s21, 1
      %p132 = por %p130, %p131
      %p133 = scmp.ne.s32.totalorder %s125, %s128
      %p134 = scmp.eq.s32.totalorder %s21, 0
      %p135 = por %p133, %p134
      %p136 = scmp.ne.s32.totalorder %s125, %s128
      %p137 = scmp.eq.s32.totalorder %s26, 1
      %p138 = por %p136, %p137
      %p139 = scmp.ne.s32.totalorder %s128, %s129
      %p140 = scmp.eq.s32.totalorder %s26, 0
      %p141 = por %p139, %p140
      %p142 = scmp.ne.s32.totalorder %s128, %s129
      %p143 = scmp.eq.s32.totalorder %s27, 1
      %p144 = por %p142, %p143
      %p146 = scmp.ne.s32.totalorder %s129, %s145
      %p147 = scmp.eq.s32.totalorder %s27, 0
      %p148 = por %p146, %p147
      %s149 = ssub.s32 %s28, %s40
      %p150 = scmp.eq.s32.totalorder %s149, 0
      %s152 = sadd.s32 %s151, 1
      %s153 = scalar_select %p150, %s151, %s152
      %p156 = pneg %p150
      %p157 = scmp.eq.s32.totalorder %s21, 1
      %p158 = por %p156, %p157
      %p159 = scmp.ne.s32.totalorder %s151, %s154
      %p160 = scmp.eq.s32.totalorder %s21, 0
      %p161 = por %p159, %p160
      %p162 = scmp.ne.s32.totalorder %s151, %s154
      %p163 = scmp.eq.s32.totalorder %s26, 1
      %p164 = por %p162, %p163
      %p165 = scmp.ne.s32.totalorder %s154, %s155
      %p166 = scmp.eq.s32.totalorder %s26, 0
      %p167 = por %p165, %p166
      %p168 = scmp.ne.s32.totalorder %s154, %s155
      %p169 = scmp.eq.s32.totalorder %s27, 1
      %p170 = por %p168, %p169
      %p172 = scmp.ne.s32.totalorder %s155, %s171
      %p173 = scmp.eq.s32.totalorder %s27, 0
      %p174 = por %p172, %p173
      %s175 = ssub.s32 %s28, %s40
      %p176 = scmp.eq.s32.totalorder %s175, 0
      %s178 = sadd.s32 %s177, 1
      %s179 = scalar_select %p176, %s177, %s178
      %p182 = pneg %p176
      %p183 = scmp.eq.s32.totalorder %s21, 1
      %p184 = por %p182, %p183
      %p185 = scmp.ne.s32.totalorder %s177, %s180
      %p186 = scmp.eq.s32.totalorder %s21, 0
      %p187 = por %p185, %p186
      %p188 = scmp.ne.s32.totalorder %s177, %s180
      %p189 = scmp.eq.s32.totalorder %s26, 1
      %p190 = por %p188, %p189
      %p191 = scmp.ne.s32.totalorder %s180, %s181
      %p192 = scmp.eq.s32.totalorder %s26, 0
      %p193 = por %p191, %p192
      %p194 = scmp.ne.s32.totalorder %s180, %s181
      %p195 = scmp.eq.s32.totalorder %s27, 1
      %p196 = por %p194, %p195
      %p198 = scmp.ne.s32.totalorder %s181, %s197
      %p199 = scmp.eq.s32.totalorder %s27, 0
      %p200 = por %p198, %p199
      %s202 = sadd.s32 %s201, 1
      %p205 = scmp.eq.s32.totalorder %s21, 1
      %p206 = scmp.ne.s32.totalorder %s201, %s203
      %p207 = scmp.eq.s32.totalorder %s21, 0
      %p208 = por %p206, %p207
      %p209 = scmp.ne.s32.totalorder %s201, %s203
      %p210 = scmp.eq.s32.totalorder %s26, 1
      %p211 = por %p209, %p210
      %p212 = scmp.ne.s32.totalorder %s203, %s204
      %p213 = scmp.eq.s32.totalorder %s26, 0
      %p214 = por %p212, %p213
      %p215 = scmp.ne.s32.totalorder %s203, %s204
      %p216 = scmp.eq.s32.totalorder %s27, 1
      %p217 = por %p215, %p216
      %p219 = scmp.ne.s32.totalorder %s204, %s218
      %p220 = scmp.eq.s32.totalorder %s27, 0
      %p221 = por %p219, %p220
      %s223 = sadd.s32 %s222, 1
      %p226 = scmp.eq.s32.totalorder %s21, 1
      %p227 = scmp.ne.s32.totalorder %s222, %s224
      %p228 = scmp.eq.s32.totalorder %s21, 0
      %p229 = por %p227, %p228
      %p230 = scmp.ne.s32.totalorder %s222, %s224
      %p231 = scmp.eq.s32.totalorder %s26, 1
      %p232 = por %p230, %p231
      %p233 = scmp.ne.s32.totalorder %s224, %s225
      %p234 = scmp.eq.s32.totalorder %s26, 0
      %p235 = por %p233, %p234
      %p236 = scmp.ne.s32.totalorder %s224, %s225
      %p237 = scmp.eq.s32.totalorder %s27, 1
      %p238 = por %p236, %p237
      %p240 = scmp.ne.s32.totalorder %s225, %s239
      %p241 = scmp.eq.s32.totalorder %s27, 0
      %p242 = por %p240, %p241
      %s244 = sadd.s32 %s243, 1
      %p247 = scmp.eq.s32.totalorder %s21, 1
      %p248 = scmp.ne.s32.totalorder %s243, %s245
      %p249 = scmp.eq.s32.totalorder %s21, 0
      %p250 = por %p248, %p249
      %p251 = scmp.ne.s32.totalorder %s243, %s245
      %p252 = scmp.eq.s32.totalorder %s26, 1
      %p253 = por %p251, %p252
      %p254 = scmp.ne.s32.totalorder %s245, %s246
      %p255 = scmp.eq.s32.totalorder %s26, 0
      %p256 = por %p254, %p255
      %p257 = scmp.ne.s32.totalorder %s245, %s246
      %p258 = scmp.eq.s32.totalorder %s27, 1
      %p259 = por %p257, %p258
      %p261 = scmp.ne.s32.totalorder %s246, %s260
      %p262 = scmp.eq.s32.totalorder %s27, 0
      %p263 = por %p261, %p262
      %s265 = sadd.s32 %s264, 1
      %p268 = scmp.eq.s32.totalorder %s21, 1
      %p269 = scmp.ne.s32.totalorder %s264, %s266
      %p270 = scmp.eq.s32.totalorder %s21, 0
      %p271 = por %p269, %p270
      %p272 = scmp.ne.s32.totalorder %s264, %s266
      %p273 = scmp.eq.s32.totalorder %s26, 1
      %p274 = por %p272, %p273
      %p275 = scmp.ne.s32.totalorder %s266, %s267
      %p276 = scmp.eq.s32.totalorder %s26, 0
      %p277 = por %p275, %p276
      %p278 = scmp.ne.s32.totalorder %s266, %s267
      %p279 = scmp.eq.s32.totalorder %s27, 1
      %p280 = por %p278, %p279
      %p282 = scmp.ne.s32.totalorder %s267, %s281
      %p283 = scmp.eq.s32.totalorder %s27, 0
      %p284 = por %p282, %p283
      %s286 = sadd.s32 %s285, 1
      %p289 = scmp.eq.s32.totalorder %s21, 1
      %p290 = scmp.ne.s32.totalorder %s285, %s287
      %p291 = scmp.eq.s32.totalorder %s21, 0
      %p292 = por %p290, %p291
      %p293 = scmp.ne.s32.totalorder %s285, %s287
      %p294 = scmp.eq.s32.totalorder %s26, 1
      %p295 = por %p293, %p294
      %p296 = scmp.ne.s32.totalorder %s287, %s288
      %p297 = scmp.eq.s32.totalorder %s26, 0
      %p298 = por %p296, %p297
      %p299 = scmp.ne.s32.totalorder %s287, %s288
      %p300 = scmp.eq.s32.totalorder %s27, 1
      %p301 = por %p299, %p300
      %p303 = scmp.ne.s32.totalorder %s288, %s302
      %p304 = scmp.eq.s32.totalorder %s27, 0
      %p305 = por %p303, %p304
      %s307 = sadd.s32 %s306, 1
      %p310 = scmp.eq.s32.totalorder %s21, 1
      %p311 = scmp.ne.s32.totalorder %s306, %s308
      %p312 = scmp.eq.s32.totalorder %s21, 0
      %p313 = por %p311, %p312
      %p314 = scmp.ne.s32.totalorder %s306, %s308
      %p315 = scmp.eq.s32.totalorder %s26, 1
      %p316 = por %p314, %p315
      %p317 = scmp.ne.s32.totalorder %s308, %s309
      %p318 = scmp.eq.s32.totalorder %s26, 0
      %p319 = por %p317, %p318
      %p320 = scmp.ne.s32.totalorder %s308, %s309
      %p321 = scmp.eq.s32.totalorder %s27, 1
      %p322 = por %p320, %p321
      %p324 = scmp.ne.s32.totalorder %s309, %s323
      %p325 = scmp.eq.s32.totalorder %s27, 0
      %p326 = por %p324, %p325
      %s327 = ssub.s32 %s28, %s40
      %s328 = ssub.s32 %s29, %s36
      %s329 = sor.u32 %s327, %s328
      %p330 = scmp.eq.s32.totalorder %s329, 0
      %s332 = sadd.s32 %s331, 1
      %s333 = scalar_select %p330, %s331, %s332
      %p336 = pneg %p330
      %p337 = scmp.eq.s32.totalorder %s21, 1
      %p338 = por %p336, %p337
      %p339 = scmp.ne.s32.totalorder %s331, %s334
      %p340 = scmp.eq.s32.totalorder %s21, 0
      %p341 = por %p339, %p340
      %p342 = scmp.ne.s32.totalorder %s331, %s334
      %p343 = scmp.eq.s32.totalorder %s26, 1
      %p344 = por %p342, %p343
      %p345 = scmp.ne.s32.totalorder %s334, %s335
      %p346 = scmp.eq.s32.totalorder %s26, 0
      %p347 = por %p345, %p346
      %p348 = scmp.ne.s32.totalorder %s334, %s335
      %p349 = scmp.eq.s32.totalorder %s27, 1
      %p350 = por %p348, %p349
      %p352 = scmp.ne.s32.totalorder %s335, %s351
      %p353 = scmp.eq.s32.totalorder %s27, 0
      %p354 = por %p352, %p353
      %p355 = scmp.le.s32.totalorder 1, %s21
      %p356 = scmp.lt.s32.totalorder %s21, 3
      %p357 = pnand %p355, %p356
      %p358 = pneg %p357
      // Predicated region
      $region9: #{dit_block.5} parent=5 // pred_check
        _
      $region10: #{dit_block.5} parent=5 // pred_check_branch
        %360 = sbr.rel (%p357) target = $region12
      $region11: #{dit_block.5} parent=5 // pred_region
        %s361 = ssub.s32 %s21, 1
        // Predicated region
        $region13: #{dit_block.5} parent=11 // pred_check
          %p362 = pneg %p214
        $region14: #{dit_block.5} parent=11 // pred_check_branch
          %364 = sbr.rel (%p362) target = $region16
        $region15: #{dit_block.5} parent=11 // pred_region
          _
        $region16: #{dit_block.5} parent=11 // pred_fallthru
          _
        // Predicated region
        $region17: #{dit_block.5} parent=11 // pred_check
          %p365 = pneg %p235
        $region18: #{dit_block.5} parent=11 // pred_check_branch
          %367 = sbr.rel (%p365) target = $region20
        $region19: #{dit_block.5} parent=11 // pred_region
          _
        $region20: #{dit_block.5} parent=11 // pred_fallthru
          _
        // Predicated region
        $region21: #{dit_block.5} parent=11 // pred_check
          %p368 = pneg %p256
        $region22: #{dit_block.5} parent=11 // pred_check_branch
          %370 = sbr.rel (%p368) target = $region24
        $region23: #{dit_block.5} parent=11 // pred_region
          _
        $region24: #{dit_block.5} parent=11 // pred_fallthru
          _
        // Predicated region
        $region25: #{dit_block.5} parent=11 // pred_check
          %p371 = pneg %p277
        $region26: #{dit_block.5} parent=11 // pred_check_branch
          %373 = sbr.rel (%p371) target = $region28
        $region27: #{dit_block.5} parent=11 // pred_region
          _
        $region28: #{dit_block.5} parent=11 // pred_fallthru
          _
        // Predicated region
        $region29: #{dit_block.5} parent=11 // pred_check
          %p374 = pneg %p298
        $region30: #{dit_block.5} parent=11 // pred_check_branch
          %376 = sbr.rel (%p374) target = $region32
        $region31: #{dit_block.5} parent=11 // pred_region
          _
        $region32: #{dit_block.5} parent=11 // pred_fallthru
          _
        // Predicated region
        $region33: #{dit_block.5} parent=11 // pred_check
          %p377 = pneg %p319
        $region34: #{dit_block.5} parent=11 // pred_check_branch
          %379 = sbr.rel (%p377) target = $region36
        $region35: #{dit_block.5} parent=11 // pred_region
          _
        $region36: #{dit_block.5} parent=11 // pred_fallthru
          _
      $region12: #{dit_block.5} parent=5 // pred_fallthru
        _
      %p380 = scmp.lt.s32.totalorder %s21, 2
      // Predicated region
      $region37: #{dit_block.5} parent=5 // pred_check
        %p381 = pneg %p380
      $region38: #{dit_block.5} parent=5 // pred_check_branch
        %383 = sbr.rel (%p381) target = $region40
      $region39: #{dit_block.5} parent=5 // pred_region
        // Predicated region
        $region41: #{dit_block.5} parent=39 // pred_check
          %p384 = pneg %p55
        $region42: #{dit_block.5} parent=39 // pred_check_branch
          %386 = sbr.rel (%p384) target = $region44
        $region43: #{dit_block.5} parent=39 // pred_region
          %p387 = scmp.lt.s32.totalorder %s28, 1
          %s388 = scalar_select %p387, %s28, 1
          %p389 = scmp.lt.s32.totalorder %s29, 0
          %s390 = scalar_select %p389, %s29, 0
          %s391 = sadd.s32 %s390, %s388
          %s392 = smul.addr %s391, 8
          %s393 = scalar_lea.vmem %s0, %s392
        $region44: #{dit_block.5} parent=39 // pred_fallthru
          _
        // Predicated region
        $region45: #{dit_block.5} parent=39 // pred_check
          %p394 = pneg %p83
        $region46: #{dit_block.5} parent=39 // pred_check_branch
          %396 = sbr.rel (%p394) target = $region48
        $region47: #{dit_block.5} parent=39 // pred_region
          %p397 = scmp.lt.s32.totalorder %s28, 1
          %s398 = scalar_select %p397, %s28, 1
          %p399 = scmp.lt.s32.totalorder %s29, 0
          %s400 = scalar_select %p399, %s29, 0
          %s401 = sadd.s32 %s400, %s398
          %s402 = smul.addr %s401, 8
          %s403 = scalar_lea.vmem %s1, %s402
        $region48: #{dit_block.5} parent=39 // pred_fallthru
          _
        // Predicated region
        $region49: #{dit_block.5} parent=39 // pred_check
          %p404 = pneg %p109
        $region50: #{dit_block.5} parent=39 // pred_check_branch
          %406 = sbr.rel (%p404) target = $region52
        $region51: #{dit_block.5} parent=39 // pred_region
          %p407 = scmp.lt.s32.totalorder %s28, 1
          %s408 = scalar_select %p407, %s28, 1
          %s409 = scalar_lea.vmem %s2, %s408
        $region52: #{dit_block.5} parent=39 // pred_fallthru
          _
        // Predicated region
        $region53: #{dit_block.5} parent=39 // pred_check
          %p410 = pneg %p135
        $region54: #{dit_block.5} parent=39 // pred_check_branch
          %412 = sbr.rel (%p410) target = $region56
        $region55: #{dit_block.5} parent=39 // pred_region
          %p413 = scmp.lt.s32.totalorder %s28, 1
          %s414 = scalar_select %p413, %s28, 1
          %s415 = scalar_lea.vmem %s3, %s414
        $region56: #{dit_block.5} parent=39 // pred_fallthru
          _
        // Predicated region
        $region57: #{dit_block.5} parent=39 // pred_check
          %p416 = pneg %p161
        $region58: #{dit_block.5} parent=39 // pred_check_branch
          %418 = sbr.rel (%p416) target = $region60
        $region59: #{dit_block.5} parent=39 // pred_region
          %p419 = scmp.lt.s32.totalorder %s28, 1
          %s420 = scalar_select %p419, %s28, 1
          %s421 = scalar_lea.vmem %s4, %s420
        $region60: #{dit_block.5} parent=39 // pred_fallthru
          _
        // Predicated region
        $region61: #{dit_block.5} parent=39 // pred_check
          %p422 = pneg %p187
        $region62: #{dit_block.5} parent=39 // pred_check_branch
          %424 = sbr.rel (%p422) target = $region64
        $region63: #{dit_block.5} parent=39 // pred_region
          %p425 = scmp.lt.s32.totalorder %s28, 1
          %s426 = scalar_select %p425, %s28, 1
          %s427 = scalar_lea.vmem %s5, %s426
        $region64: #{dit_block.5} parent=39 // pred_fallthru
          _
      $region40: #{dit_block.5} parent=5 // pred_fallthru
        _
      %p428 = scmp.le.s32.totalorder 1, %s21
      %p429 = scmp.lt.s32.totalorder %s21, 3
      %p430 = pnand %p428, %p429
      %p431 = pneg %p430
      // Predicated region
      $region65: #{dit_block.5} parent=5 // pred_check
        _
      $region66: #{dit_block.5} parent=5 // pred_check_branch
        %433 = sbr.rel (%p430) target = $region68
      $region67: #{dit_block.5} parent=5 // pred_region
        %s434 = ssub.s32 %s21, 1
        %p435 = scmp.lt.s32.totalorder %s30, 1
        %s436 = scalar_select %p435, %s30, 1
        %p437 = scmp.lt.s32.totalorder %s31, 0
        %s438 = scalar_select %p437, %s31, 0
        %s439 = sadd.s32 %s438, %s436
        %s440 = smul.addr %s439, 8
        %s441 = scalar_lea.vmem %s0, %s440
        %p442 = pneg %p61
        %p443 = pneg %p58
        %p444 = scmp.lt.s32.totalorder %s30, 1
        %s445 = scalar_select %p444, %s30, 1
        %p446 = scmp.lt.s32.totalorder %s31, 0
        %s447 = scalar_select %p446, %s31, 0
        %s448 = sadd.s32 %s447, %s445
        %s449 = smul.addr %s448, 8
        %s450 = scalar_lea.vmem %s1, %s449
        %p451 = pneg %p89
        %p452 = pneg %p86
        %p453 = scmp.lt.s32.totalorder %s30, 1
        %s454 = scalar_select %p453, %s30, 1
        %s455 = scalar_lea.vmem %s2, %s454
        %p456 = pneg %p115
        %p457 = pneg %p112
        %p458 = scmp.lt.s32.totalorder %s30, 1
        %s459 = scalar_select %p458, %s30, 1
        %s460 = scalar_lea.vmem %s3, %s459
        %p461 = pneg %p141
        %p462 = pneg %p138
        %p463 = scmp.lt.s32.totalorder %s30, 1
        %s464 = scalar_select %p463, %s30, 1
        %s465 = scalar_lea.vmem %s4, %s464
        %p466 = pneg %p167
        %p467 = pneg %p164
        %p468 = scmp.lt.s32.totalorder %s30, 1
        %s469 = scalar_select %p468, %s30, 1
        %s470 = scalar_lea.vmem %s5, %s469
        %p471 = pneg %p193
        %p472 = pneg %p190
        %p473 = pneg %p214
        %p474 = pneg %p211
        %p475 = pneg %p235
        %p476 = pneg %p232
        %p477 = pneg %p256
        %p478 = pneg %p253
        %p479 = pneg %p277
        %p480 = pneg %p274
        %p481 = pneg %p298
        %p482 = pneg %p295
        %p483 = pneg %p319
        %p484 = pneg %p316
        %p485 = pneg %p347
        %p486 = pneg %p344
        %s487 = sand.u32 %s334, 1
        %s488 = scalar_lea.sflag [#allocation3], %s487
        %s489 = sand.u32 %s334, 1
        %s490 = smul.addr %s489, 8
        %s491 = scalar_lea.vmem [#allocation2], %s490
        %p492 = scmp.lt.s32.totalorder %s30, 1
        %s493 = scalar_select %p492, %s30, 1
        %p494 = scmp.lt.s32.totalorder %s31, 0
        %s495 = scalar_select %p494, %s31, 0
        %s496 = sadd.s32 %s495, %s493
        %s497 = smul.addr %s496, 8
        %s498 = scalar_lea.vmem %s0, %s497
        %p499 = scmp.lt.s32.totalorder %s30, 1
        %s500 = scalar_select %p499, %s30, 1
        %p501 = scmp.lt.s32.totalorder %s31, 0
        %s502 = scalar_select %p501, %s31, 0
        %s503 = sadd.s32 %s502, %s500
        %s504 = smul.addr %s503, 8
        %s505 = scalar_lea.vmem %s1, %s504
        %p506 = scmp.lt.s32.totalorder %s30, 1
        %s507 = scalar_select %p506, %s30, 1
        %s508 = scalar_lea.vmem %s2, %s507
        %p509 = scmp.lt.s32.totalorder %s30, 1
        %s510 = scalar_select %p509, %s30, 1
        %s511 = scalar_lea.vmem %s3, %s510
        %p512 = scmp.lt.s32.totalorder %s30, 1
        %s513 = scalar_select %p512, %s30, 1
        %s514 = scalar_lea.vmem %s4, %s513
        %p515 = scmp.lt.s32.totalorder %s30, 1
        %s516 = scalar_select %p515, %s30, 1
        %s517 = scalar_lea.vmem %s5, %s516
        %v518 = vld [vmem:[%s498] sm:$0xff]
        %v519 = vld [vmem:[%s505] sm:$0xff]
        %v520 = vld [vmem:[%s508] sm:$0x1]
        %v521 = vld [vmem:[%s511] sm:$0x1]
        %v522 = vld [vmem:[%s514] sm:$0x1]
        %v523 = vld [vmem:[%s517] sm:$0x1]
        %v524 = vld [vmem:[%s6] sm:$0xff]
        %v525 = vld [vmem:[%s6 + $0x8] sm:$0xff]
        %v526 = vld [vmem:[%s6 + $0x10] sm:$0xff]
        %v527 = vld [vmem:[%s6 + $0x18] sm:$0xff]
        %v528 = vld [vmem:[%s7] sm:$0x1]
        %v530 = vperm.slane %v528, 0
        %vm532 = vcmask 261120
        %v534 = vsel %vm532, %v518, 0
        %536 = vmatpush.msra.mxu0 0.0
        %537 = vmatpush.msra.mxu0 0.0
        %538 = vmatpush.msra.mxu0 0.0
        %539 = vmatpush.msra.mxu0 0.0
        %540 = vmatpush.msra.mxu0 0.0
        %541 = vmatpush.msra.mxu0 0.0
        %542 = vmatpush.msra.mxu0 0.0
        %543 = vmatpush.msra.mxu0 0.0
        %544 = vmatpush.msra.mxu0 0.0
        %545 = vmatpush.msra.mxu0 0.0
        %546 = vmatpush.msra.mxu0 0.0
        %547 = vmatpush.msra.mxu0 0.0
        %548 = vmatpush.msra.mxu0 %v527
        %549 = vmatpush.msra.mxu0 %v526
        %550 = vmatpush.msra.mxu0 %v525
        %551 = vmatpush.msra.mxu0 %v524
        %552 = vmatmul.f32.gmra.mxu0 %v534
        %v553 = vpop.f32.mrf.mxu0
        %v554 = vadd.f32 %v530, %v553
        %555 = vdwg.mxu0
        %v557 = vperm.slane %v520, 0
        %v559 = vmul.f32 %v554, %v557
        %v560 = vadd.f32 %v519, %v559
        %v561 = vsel %vm532, %v560, 0.0
        %562 = vadd.xlane.f32.xlu0 %v561
        %v563 = vpop.xlane.xlu0 %562
        %v564 = vrcp.pop 32.0
        %v565 = vmul.f32 32.0, %v564
        %v566 = vsub.f32 1.0, %v565
        %v567 = vmul.f32 %v564, %v566
        %v568 = vadd.f32 %v564, %v567
        %vm569 = vweird.f32 %v564
        %v570 = vsel %vm569, %v564, %v568
        %v571 = vmul.f32 %v563, %v570
        %v572 = vmul.f32 %v560, %v560
        %v573 = vsel %vm532, %v572, 0.0
        %574 = vadd.xlane.f32.xlu0 %v573
        %v575 = vpop.xlane.xlu0 %574
        %v576 = vmul.f32 %v575, %v570
        %v577 = vsub.f32 %v560, %v571
        %v578 = vmul.f32 %v571, %v571
        %v579 = vsub.f32 %v576, %v578
        %v580 = vadd.f32 %v579, 1e-06
        %v581 = vrsqrt.pop %v580
        %v582 = vmul.f32 %v581, %v580
        %v583 = vmul.f32 %v582, %v581
        %v584 = vmul.f32 0.5, %v583
        %v585 = vsub.f32 1.5, %v584
        %v586 = vmul.f32 %v581, %v585
        %vm587 = vweird.f32 %v580
        %vm588 = vweird.f32 %v581
        %vm589 = vmor %vm587, %vm588
        %v590 = vsel %vm589, %v581, %v586
        %v591 = vmul.f32 %v577, %v590
        %v592 = vadd.f32 %v521, 1.0
        %v594 = vperm.slane %v592, 0
        %v596 = vmul.f32 %v591, %v594
        %v598 = vperm.slane %v522, 0
        %v600 = vadd.f32 %v596, %v598
        %v601 = vld [vmem:[%s8] sm:$0xff]
        %v602 = vld [vmem:[%s8 + $0x8] sm:$0xff]
        %v603 = vld [vmem:[%s8 + $0x10] sm:$0xff]
        %v604 = vld [vmem:[%s8 + $0x18] sm:$0xff]
        %v605 = vld [vmem:[%s9] sm:$0x1]
        %v607 = vperm.slane %v605, 0
        %v610 = vsel %vm532, %v600, 0
        %612 = vmatpush.msra.mxu0 0.0
        %613 = vmatpush.msra.mxu0 0.0
        %614 = vmatpush.msra.mxu0 0.0
        %615 = vmatpush.msra.mxu0 0.0
        %616 = vmatpush.msra.mxu0 0.0
        %617 = vmatpush.msra.mxu0 0.0
        %618 = vmatpush.msra.mxu0 0.0
        %619 = vmatpush.msra.mxu0 0.0
        %620 = vmatpush.msra.mxu0 0.0
        %621 = vmatpush.msra.mxu0 0.0
        %622 = vmatpush.msra.mxu0 0.0
        %623 = vmatpush.msra.mxu0 0.0
        %624 = vmatpush.msra.mxu0 %v604
        %625 = vmatpush.msra.mxu0 %v603
        %626 = vmatpush.msra.mxu0 %v602
        %627 = vmatpush.msra.mxu0 %v601
        %628 = vmatmul.f32.gmra.mxu0 %v610
        %v629 = vpop.f32.mrf.mxu0
        %v630 = vadd.f32 %v607, %v629
        %631 = vdwg.mxu0
        %v632 = vmul.f32 %v630, %v630
        %v633 = vmul.f32 %v630, %v632
        %v634 = vmul.f32 %v633, 0.044715
        %v635 = vadd.f32 %v630, %v634
        %v636 = vmul.f32 %v635, 0.7978846
        %v637 = vtanh.pop %v636
        %v638 = vadd.f32 %v637, 1.0
        %v639 = vmul.f32 %v638, 0.5
        %v640 = vmul.f32 %v630, %v639
        %v641 = vld [vmem:[%s10] sm:$0xff]
        %v642 = vld [vmem:[%s10 + $0x8] sm:$0xff]
        %v643 = vld [vmem:[%s10 + $0x10] sm:$0xff]
        %v644 = vld [vmem:[%s10 + $0x18] sm:$0xff]
        %v645 = vld [vmem:[%s10 + $0x20] sm:$0xff]
        %v646 = vld [vmem:[%s10 + $0x28] sm:$0xff]
        %v647 = vld [vmem:[%s10 + $0x30] sm:$0xff]
        %v648 = vld [vmem:[%s10 + $0x38] sm:$0xff]
        %v649 = vld [vmem:[%s10 + $0x40] sm:$0xff]
        %v650 = vld [vmem:[%s10 + $0x48] sm:$0xff]
        %v651 = vld [vmem:[%s10 + $0x50] sm:$0xff]
        %v652 = vld [vmem:[%s10 + $0x58] sm:$0xff]
        %v653 = vld [vmem:[%s10 + $0x60] sm:$0xff]
        %v654 = vld [vmem:[%s10 + $0x68] sm:$0xff]
        %v655 = vld [vmem:[%s10 + $0x70] sm:$0xff]
        %v656 = vld [vmem:[%s10 + $0x78] sm:$0xff]
        %v657 = vld [vmem:[%s11] sm:$0x1]
        %v659 = vperm.slane %v657, 0
        %661 = vmatpush.msra.mxu0 %v656
        %662 = vmatpush.msra.mxu0 %v655
        %663 = vmatpush.msra.mxu0 %v654
        %664 = vmatpush.msra.mxu0 %v653
        %665 = vmatpush.msra.mxu0 %v652
        %666 = vmatpush.msra.mxu0 %v651
        %667 = vmatpush.msra.mxu0 %v650
        %668 = vmatpush.msra.mxu0 %v649
        %669 = vmatpush.msra.mxu0 %v648
        %670 = vmatpush.msra.mxu0 %v647
        %671 = vmatpush.msra.mxu0 %v646
        %672 = vmatpush.msra.mxu0 %v645
        %673 = vmatpush.msra.mxu0 %v644
        %674 = vmatpush.msra.mxu0 %v643
        %675 = vmatpush.msra.mxu0 %v642
        %676 = vmatpush.msra.mxu0 %v641
        %677 = vmatmul.f32.gmra.mxu0 %v640
        %v678 = vpop.f32.mrf.mxu0
        %v679 = vadd.f32 %v659, %v678
        %680 = vdwg.mxu0
        %v682 = vperm.slane %v523, 0
        %v684 = vmul.f32 %v679, %v682
        %v685 = vadd.f32 %v560, %v684
        %686 = vst.msk [vmem:[%s491] sm:$0xff] %vm532, %v685
        %s687 = sand.u32 %s334, 1
        %s688 = scalar_lea.sflag [#allocation3], %s687
        %s689 = sand.u32 %s334, 1
        %s690 = smul.addr %s689, 8
        %s691 = scalar_lea.vmem [#allocation2], %s690
        // Predicated region
        $region69: #{dit_block.5} parent=67 // pred_check
          %p692 = pneg %p344
        $region70: #{dit_block.5} parent=67 // pred_check_branch
          %694 = sbr.rel (%p692) target = $region72
        $region71: #{dit_block.5} parent=67 // pred_region
          %696 = vsyncadd %s688, 0
          %s697 = sadd.s32 %s31, %s30
          %s698 = smul.addr %s697, 8
          %s699 = scalar_lea.hbm %s12, %s698
          %s701 = sshll.u32 %s691, 4
          %s702 = int_to_ptr.vmem [resolvable:$true] %s701
          %s703 = sshll.u32 %s699, 4
          %s704 = int_to_ptr.hbm [resolvable:$true] %s703
          %706 = dma.vmem_to_hbm [thread:$0]  %s702, 128, %s704, %s688
        $region72: #{dit_block.5} parent=67 // pred_fallthru
          _
      $region68: #{dit_block.5} parent=5 // pred_fallthru
        _
      %p707 = scmp.le.s32.totalorder 2, %s21
      // Predicated region
      $region73: #{dit_block.5} parent=5 // pred_check
        %p708 = pneg %p707
      $region74: #{dit_block.5} parent=5 // pred_check_branch
        %710 = sbr.rel (%p708) target = $region76
      $region75: #{dit_block.5} parent=5 // pred_region
        %s711 = ssub.s32 %s21, 2
        // Predicated region
        $region77: #{dit_block.5} parent=75 // pred_check
          %p712 = pneg %p350
        $region78: #{dit_block.5} parent=75 // pred_check_branch
          %714 = sbr.rel (%p712) target = $region80
        $region79: #{dit_block.5} parent=75 // pred_region
          %s715 = sand.u32 %s335, 1
          %s716 = scalar_lea.sflag [#allocation3], %s715
          %s717 = sand.u32 %s335, 1
          %s718 = smul.addr %s717, 8
          %s719 = scalar_lea.vmem [#allocation2], %s718
          %721 = dma.done %s716, 128
        $region80: #{dit_block.5} parent=75 // pred_fallthru
          _
      $region76: #{dit_block.5} parent=5 // pred_fallthru
        _
    $region6: #{dit_block.5} parent=1 // loop_footer
      %s25 = sadd.s32 1, %s21
    $region7: #{dit_block.5} parent=1 // loop_footer_branch
      %20 = sbr.rel target = $region3
    $region8: #{dit_block.5} parent=1 // loop_exit
      _
    %722 = vsyncpa [#allocation3], 1
    %s723 = scalar_lea.sflag [#allocation3], 1
    %724 = vsyncpa %s723, 1

</llo_original>
